<compile_context>
chip_gen: v6e
topology: v6e:2x2x1
jax: 0.10.0
libtpu: 0.0.40
codegen_flags: <defaults>
</compile_context>

<pallas_src>
import functools

import jax
import jax.numpy as jnp
from jax.experimental import pallas as pl
from jax.experimental.pallas import tpu as pltpu


# ----------------------------------------------------------------------------
# Fused Pallas kernel: all Dblocks + final projection
# ----------------------------------------------------------------------------
def disc_kernel(num_blocks, x_ref, kp_ref, kn_ref, *rest):
    """rest = [w1f, b1, w2f, b2] * num_blocks, wl_tiled, pool, bl,
              feat_out * num_blocks, proj_out."""
    n_wb = 4 * num_blocks
    block_refs = rest[:n_wb]
    wl_ref, pool_ref, bl_ref = rest[n_wb:n_wb + 3]
    feat_refs = rest[n_wb + 3:n_wb + 3 + num_blocks]
    out_ref = rest[n_wb + 3 + num_blocks]

    # Hoisted per-sample boundary masks (1, N) — reused by every conv.
    kp = kp_ref[...]   # zero where within-sample index == 0
    kn = kn_ref[...]   # zero where within-sample index == L-1

    def conv(h, wf_ref, b_ref):
        # h: (Cin, N).  One matmul with K = 3*Cin; taps built on the input side.
        n = h.shape[-1]
        hp = pltpu.roll(h, shift=1, axis=1) * kp        # holds x[l-1], zero at l==0
        hn = pltpu.roll(h, shift=n - 1, axis=1) * kn    # holds x[l+1], zero at l==L-1
        hs = jnp.concatenate([hp, h, hn], axis=0)       # (3*Cin, N)
        return (
            jnp.dot(wf_ref[...], hs, preferred_element_type=jnp.float32)
            + b_ref[...]                                 # (Cout, 1) broadcast over lanes
        )

    h = x_ref[...]                                       # (Cin0, N) stays in VMEM/vregs
    for i in range(num_blocks):
        w1f, b1, w2f, b2 = block_refs[4 * i:4 * i + 4]
        y1 = conv(h, w1f, b1)                            # (Cout, N)
        z = jnp.where(y1 > 0, y1, 0.2 * y1)              # LeakyReLU(0.2)
        y2 = conv(z, w2f, b2)
        h = y1 + y2
        feat_refs[i][...] = h                            # lane-dense feature store

    # Fused spectral-norm Linear projection: out[b] = sum_{c,l} h[c,b*L+l]*W[c,l] + b
    prod = h * wl_ref[...]                               # (C_last, N)
    colsum = jnp.sum(prod, axis=0, keepdims=True)        # (1, N)  sublane reduce
    out_ref[0] = (
        jnp.dot(colsum, pool_ref[...], preferred_element_type=jnp.float32)
        + bl_ref[...]
    )                                                    # (1, bt)


# ----------------------------------------------------------------------------
# Wrapper
# ----------------------------------------------------------------------------
def _pick_batch_tile(B, L):
    # Prefer splitting the batch across grid steps when each tile is still
    # lane-dense (multiple of 128 lanes); otherwise fold the whole batch into
    # the lane axis of a single tile (grid degenerates to (1,)).
    for bt in range(1, B):
        if B % bt == 0 and (bt * L) % 128 == 0:
            return bt
    return B


def make_constants(L, bt):
    """Per-sample boundary masks and the per-tile batch-pooling matrix."""
    col = jnp.arange(bt * L, dtype=jnp.int32)
    within = col % L
    keep_prev = jnp.where(within == 0, 0.0, 1.0).astype(jnp.float32)[None, :]
    keep_next = jnp.where(within == L - 1, 0.0, 1.0).astype(jnp.float32)[None, :]
    pool = ((col[:, None] // L) == jnp.arange(bt, dtype=jnp.int32)[None, :]).astype(
        jnp.float32
    )                                                    # (bt*L, bt)
    return keep_prev, keep_next, pool


def preprocess_params(params, proj, L, bt):
    """One-time weight layout preprocessing (hoisted out of the forward pass)."""
    blocks = []
    for (w1, b1, w2, b2) in params:
        cout = w1.shape[0]
        # (Cout, Cin, 3) -> (Cout, 3*Cin), k-major / ci-minor to match the tap stack.
        w1f = jnp.transpose(w1, (0, 2, 1)).reshape(cout, -1)
        w2f = jnp.transpose(w2, (0, 2, 1)).reshape(cout, -1)
        blocks.append((w1f, b1[:, None], w2f, b2[:, None]))
    wl, bl = proj
    c_last = params[-1][0].shape[0]
    wl_tiled = jnp.tile(wl.reshape(c_last, L), (1, bt))  # (C_last, bt*L)
    return blocks, (wl_tiled, bl.reshape(1, 1))


def discriminator_forward(x, blocks, proj_pre, consts, bt):
    B, C0, L = x.shape
    G = B // bt
    N = B * L
    couts = [blk[0].shape[0] for blk in blocks]
    num_blocks = len(blocks)

    # Layout plumbing: (B, C, L) -> lane-dense (C, B*L).
    x2d = jnp.transpose(x, (1, 0, 2)).reshape(C0, N)
    kp, kn, pool = consts
    wl_tiled, bl2 = proj_pre

    flat_params = []
    in_specs = [
        pl.BlockSpec((C0, bt * L), lambda g: (0, g)),
        pl.BlockSpec(kp.shape, lambda g: (0, 0)),
        pl.BlockSpec(kn.shape, lambda g: (0, 0)),
    ]
    for blk in blocks:
        for p in blk:
            flat_params.append(p)
            in_specs.append(pl.BlockSpec(p.shape, lambda g: (0, 0)))
    for p in (wl_tiled, pool, bl2):
        flat_params.append(p)
        in_specs.append(pl.BlockSpec(p.shape, lambda g: (0, 0)))

    out_shape = tuple(
        [jax.ShapeDtypeStruct((c, N), jnp.float32) for c in couts]
        + [jax.ShapeDtypeStruct((G, 1, bt), jnp.float32)]
    )
    out_specs = tuple(
        [pl.BlockSpec((c, bt * L), lambda g: (0, g)) for c in couts]
        + [pl.BlockSpec((1, 1, bt), lambda g: (g, 0, 0))]
    )

    outs = pl.pallas_call(
        functools.partial(disc_kernel, num_blocks),
        out_shape=out_shape,
        grid=(G,),
        in_specs=in_specs,
        out_specs=out_specs,
        compiler_params=pltpu.CompilerParams(dimension_semantics=("parallel",)),
    )(x2d, kp, kn, *flat_params)

    feats2d = outs[:num_blocks]
    logits = outs[-1].reshape(B, 1)
    # Layout plumbing back to PyTorch's (B, C, L) feature convention.
    features = [
        f.reshape(c, B, L).transpose(1, 0, 2) for f, c in zip(feats2d, couts)
    ]
    return logits, features


# ----------------------------------------------------------------------------
# Parameter construction (PyTorch-default-style init + spectral norm).
# Spectral-norm power iteration is one-time weight preprocessing in plain JAX.
# ----------------------------------------------------------------------------
def spectral_norm(w, key, n_iter=1, eps=1e-12):
    w2d = w.reshape(w.shape[0], -1)
    u = jax.random.normal(key, (w2d.shape[0],), dtype=jnp.float32)
    u = u / (jnp.linalg.norm(u) + eps)
    v = None
    for _ in range(n_iter):
        v = w2d.T @ u
        v = v / (jnp.linalg.norm(v) + eps)
        u = w2d @ v
        u = u / (jnp.linalg.norm(u) + eps)
    sigma = u @ (w2d @ v)
    return w / sigma


def init_params(key, in_channel, seglen, num_blocks):
    params = []
    ch = in_channel
    keys = iter(jax.random.split(key, num_blocks * 6 + 3))
    for _ in range(num_blocks):
        cout = 2 * ch
        bound1 = 1.0 / (ch * 3) ** 0.5
        w1 = jax.random.uniform(next(keys), (cout, ch, 3), minval=-bound1, maxval=bound1)
        b1 = jax.random.uniform(next(keys), (cout,), minval=-bound1, maxval=bound1)
        w1 = spectral_norm(w1, next(keys))
        bound2 = 1.0 / (cout * 3) ** 0.5
        w2 = jax.random.uniform(next(keys), (cout, cout, 3), minval=-bound2, maxval=bound2)
        b2 = jax.random.uniform(next(keys), (cout,), minval=-bound2, maxval=bound2)
        w2 = spectral_norm(w2, next(keys))
        params.append((w1, b1, w2, b2))
        ch = cout
    D = ch * seglen
    bound = 1.0 / D ** 0.5
    wl = jax.random.uniform(next(keys), (1, D), minval=-bound, maxval=bound)
    bl = jax.random.uniform(next(keys), (1,), minval=-bound, maxval=bound)
    wl = spectral_norm(wl, next(keys))
    return params, (wl, bl)


# ----------------------------------------------------------------------------
# Pure-JAX reference (for the sanity check)
# ----------------------------------------------------------------------------
def _conv1d_ref(x, w, b):
    y = jax.lax.conv_general_dilated(
        x, w, window_strides=(1,), padding=((1, 1),),
        dimension_numbers=("NCH", "OIH", "NCH"))
    return y + b[None, :, None]


def discriminator_ref(x, params, proj):
    features = []
    mel = x
    for (w1, b1, w2, b2) in params:
        y1 = _conv1d_ref(mel, w1, b1)
        z = jnp.where(y1 > 0, y1, 0.2 * y1)
        y2 = _conv1d_ref(z, w2, b2)
        mel = y1 + y2
        features.append(mel)
    wl, bl = proj
    flat = mel.reshape(mel.shape[0], -1)
    return flat @ wl.T + bl, features


# ----------------------------------------------------------------------------
if __name__ == "__main__":
    B, in_channel, seglen, num_blocks = 2, 4, 16, 4

    key = jax.random.PRNGKey(0)
    kx, kp_ = jax.random.split(key)
    x = jax.random.normal(kx, (B, in_channel, seglen), dtype=jnp.float32)

    params, proj = init_params(kp_, in_channel, seglen, num_blocks)

    # One-time preprocessing (not part of the per-forward cost).
    bt = _pick_batch_tile(B, seglen)
    blocks_pre, proj_pre = preprocess_params(params, proj, seglen, bt)
    consts = make_constants(seglen, bt)

    out, features = discriminator_forward(x, blocks_pre, proj_pre, consts, bt)
    out = jax.block_until_ready(out)
    features = [jax.block_until_ready(f) for f in features]

    # Sanity check against the pure-JAX reference.
    out_ref, feats_ref = discriminator_ref(x, params, proj)
    assert out.shape == (B, 1)
    assert len(features) == num_blocks
    assert jnp.allclose(out, out_ref, atol=1e-4, rtol=1e-4)
    for f, fr in zip(features, feats_ref):
        assert f.shape == fr.shape
        assert jnp.allclose(f, fr, atol=1e-4, rtol=1e-4)

    print("KERNEL_OK")
</pallas_src>

<mosaic_0001>
module attributes {stable_mosaic.version = 11 : i64} {
  func.func @disc_kernel(%arg0: i32, %arg1: memref<4x32xf32, #tpu.memory_space<vmem>>, %arg2: memref<1x32xf32, #tpu.memory_space<vmem>>, %arg3: memref<1x32xf32, #tpu.memory_space<vmem>>, %arg4: memref<8x12xf32, #tpu.memory_space<vmem>>, %arg5: memref<8x1xf32, #tpu.memory_space<vmem>>, %arg6: memref<8x24xf32, #tpu.memory_space<vmem>>, %arg7: memref<8x1xf32, #tpu.memory_space<vmem>>, %arg8: memref<16x24xf32, #tpu.memory_space<vmem>>, %arg9: memref<16x1xf32, #tpu.memory_space<vmem>>, %arg10: memref<16x48xf32, #tpu.memory_space<vmem>>, %arg11: memref<16x1xf32, #tpu.memory_space<vmem>>, %arg12: memref<32x48xf32, #tpu.memory_space<vmem>>, %arg13: memref<32x1xf32, #tpu.memory_space<vmem>>, %arg14: memref<32x96xf32, #tpu.memory_space<vmem>>, %arg15: memref<32x1xf32, #tpu.memory_space<vmem>>, %arg16: memref<64x96xf32, #tpu.memory_space<vmem>>, %arg17: memref<64x1xf32, #tpu.memory_space<vmem>>, %arg18: memref<64x192xf32, #tpu.memory_space<vmem>>, %arg19: memref<64x1xf32, #tpu.memory_space<vmem>>, %arg20: memref<64x32xf32, #tpu.memory_space<vmem>>, %arg21: memref<32x2xf32, #tpu.memory_space<vmem>>, %arg22: memref<1x1xf32, #tpu.memory_space<vmem>>, %arg23: memref<8x32xf32, #tpu.memory_space<vmem>>, %arg24: memref<16x32xf32, #tpu.memory_space<vmem>>, %arg25: memref<32x32xf32, #tpu.memory_space<vmem>>, %arg26: memref<64x32xf32, #tpu.memory_space<vmem>>, %arg27: memref<1x1x2xf32, #tpu.memory_space<vmem>>) attributes {dimension_semantics = [#tpu.dimension_semantics<parallel>], iteration_bounds = array<i64: 1>, scalar_prefetch = 0 : i64, scratch_operands = 0 : i64, tpu.core_type = #tpu.core_type<tc>, window_params = [{transform_indices = @transform_0, window_bounds = array<i64: 4, 32>}, {pipeline_mode = #tpu.pipeline_mode<synchronous>, transform_indices = @transform_1, window_bounds = array<i64: 1, 32>}, {pipeline_mode = #tpu.pipeline_mode<synchronous>, transform_indices = @transform_2, window_bounds = array<i64: 1, 32>}, {pipeline_mode = #tpu.pipeline_mode<synchronous>, transform_indices = @transform_3, window_bounds = array<i64: 8, 12>}, {pipeline_mode = #tpu.pipeline_mode<synchronous>, transform_indices = @transform_4, window_bounds = array<i64: 8, 1>}, {pipeline_mode = #tpu.pipeline_mode<synchronous>, transform_indices = @transform_5, window_bounds = array<i64: 8, 24>}, {pipeline_mode = #tpu.pipeline_mode<synchronous>, transform_indices = @transform_6, window_bounds = array<i64: 8, 1>}, {pipeline_mode = #tpu.pipeline_mode<synchronous>, transform_indices = @transform_7, window_bounds = array<i64: 16, 24>}, {pipeline_mode = #tpu.pipeline_mode<synchronous>, transform_indices = @transform_8, window_bounds = array<i64: 16, 1>}, {pipeline_mode = #tpu.pipeline_mode<synchronous>, transform_indices = @transform_9, window_bounds = array<i64: 16, 48>}, {pipeline_mode = #tpu.pipeline_mode<synchronous>, transform_indices = @transform_10, window_bounds = array<i64: 16, 1>}, {pipeline_mode = #tpu.pipeline_mode<synchronous>, transform_indices = @transform_11, window_bounds = array<i64: 32, 48>}, {pipeline_mode = #tpu.pipeline_mode<synchronous>, transform_indices = @transform_12, window_bounds = array<i64: 32, 1>}, {pipeline_mode = #tpu.pipeline_mode<synchronous>, transform_indices = @transform_13, window_bounds = array<i64: 32, 96>}, {pipeline_mode = #tpu.pipeline_mode<synchronous>, transform_indices = @transform_14, window_bounds = array<i64: 32, 1>}, {pipeline_mode = #tpu.pipeline_mode<synchronous>, transform_indices = @transform_15, window_bounds = array<i64: 64, 96>}, {pipeline_mode = #tpu.pipeline_mode<synchronous>, transform_indices = @transform_16, window_bounds = array<i64: 64, 1>}, {pipeline_mode = #tpu.pipeline_mode<synchronous>, transform_indices = @transform_17, window_bounds = array<i64: 64, 192>}, {pipeline_mode = #tpu.pipeline_mode<synchronous>, transform_indices = @transform_18, window_bounds = array<i64: 64, 1>}, {pipeline_mode = #tpu.pipeline_mode<synchronous>, transform_indices = @transform_19, window_bounds = array<i64: 64, 32>}, {pipeline_mode = #tpu.pipeline_mode<synchronous>, transform_indices = @transform_20, window_bounds = array<i64: 32, 2>}, {pipeline_mode = #tpu.pipeline_mode<synchronous>, transform_indices = @transform_21, window_bounds = array<i64: 1, 1>}, {transform_indices = @transform_22, window_bounds = array<i64: 8, 32>}, {transform_indices = @transform_23, window_bounds = array<i64: 16, 32>}, {transform_indices = @transform_24, window_bounds = array<i64: 32, 32>}, {transform_indices = @transform_25, window_bounds = array<i64: 64, 32>}, {transform_indices = @transform_26, window_bounds = array<i64: 1, 1, 2>}]} {
    %c0 = arith.constant 0 : index
    %c0_0 = arith.constant 0 : index
    %0 = vector.load %arg2[%c0, %c0_0] : memref<1x32xf32, #tpu.memory_space<vmem>>, vector<1x32xf32>
    %c0_1 = arith.constant 0 : index
    %c0_2 = arith.constant 0 : index
    %1 = vector.load %arg3[%c0_1, %c0_2] : memref<1x32xf32, #tpu.memory_space<vmem>>, vector<1x32xf32>
    %c0_3 = arith.constant 0 : index
    %c0_4 = arith.constant 0 : index
    %2 = vector.load %arg1[%c0_3, %c0_4] : memref<4x32xf32, #tpu.memory_space<vmem>>, vector<4x32xf32>
    %c1_i32 = arith.constant 1 : i32
    %3 = tpu.dynamic_rotate %2 by %c1_i32 dim 1 : vector<4x32xf32>, i32 -> vector<4x32xf32>
    %4 = vector.broadcast %0 : vector<1x32xf32> to vector<4x32xf32>
    %5 = arith.mulf %3, %4 : vector<4x32xf32>
    %c31_i32 = arith.constant 31 : i32
    %6 = tpu.dynamic_rotate %2 by %c31_i32 dim 1 : vector<4x32xf32>, i32 -> vector<4x32xf32>
    %7 = vector.broadcast %1 : vector<1x32xf32> to vector<4x32xf32>
    %8 = arith.mulf %6, %7 : vector<4x32xf32>
    %9 = tpu.concatenate %5, %2, %8 in 0 : vector<4x32xf32>, vector<4x32xf32>, vector<4x32xf32> -> vector<12x32xf32>
    %c0_5 = arith.constant 0 : index
    %c0_6 = arith.constant 0 : index
    %10 = vector.load %arg4[%c0_5, %c0_6] : memref<8x12xf32, #tpu.memory_space<vmem>>, vector<8x12xf32>
    %cst = arith.constant dense<0.000000e+00> : vector<8x32xf32>
    %11 = tpu.matmul %10, %9, %cst {dimension_numbers = #tpu.dot_dimension_numbers<[1], [0], [0], [1], [0, 0, 1, 1], [], []>} : vector<8x12xf32>, vector<12x32xf32>, vector<8x32xf32> -> vector<8x32xf32>
    %c0_7 = arith.constant 0 : index
    %c0_8 = arith.constant 0 : index
    %12 = vector.load %arg5[%c0_7, %c0_8] : memref<8x1xf32, #tpu.memory_space<vmem>>, vector<8x1xf32>
    %13 = vector.broadcast %12 : vector<8x1xf32> to vector<8x32xf32>
    %14 = arith.addf %11, %13 : vector<8x32xf32>
    %cst_9 = arith.constant 0.000000e+00 : f32
    %15 = vector.broadcast %cst_9 : f32 to vector<8x32xf32>
    %16 = arith.cmpf ogt, %14, %15 : vector<8x32xf32>
    %cst_10 = arith.constant 2.000000e-01 : f32
    %17 = vector.broadcast %cst_10 : f32 to vector<8x32xf32>
    %18 = arith.mulf %17, %14 : vector<8x32xf32>
    %19 = arith.select %16, %14, %18 : vector<8x32xi1>, vector<8x32xf32>
    %c1_i32_11 = arith.constant 1 : i32
    %20 = tpu.dynamic_rotate %19 by %c1_i32_11 dim 1 : vector<8x32xf32>, i32 -> vector<8x32xf32>
    %21 = vector.broadcast %0 : vector<1x32xf32> to vector<8x32xf32>
    %22 = arith.mulf %20, %21 : vector<8x32xf32>
    %c31_i32_12 = arith.constant 31 : i32
    %23 = tpu.dynamic_rotate %19 by %c31_i32_12 dim 1 : vector<8x32xf32>, i32 -> vector<8x32xf32>
    %24 = vector.broadcast %1 : vector<1x32xf32> to vector<8x32xf32>
    %25 = arith.mulf %23, %24 : vector<8x32xf32>
    %26 = tpu.concatenate %22, %19, %25 in 0 : vector<8x32xf32>, vector<8x32xf32>, vector<8x32xf32> -> vector<24x32xf32>
    %c0_13 = arith.constant 0 : index
    %c0_14 = arith.constant 0 : index
    %27 = vector.load %arg6[%c0_13, %c0_14] : memref<8x24xf32, #tpu.memory_space<vmem>>, vector<8x24xf32>
    %cst_15 = arith.constant dense<0.000000e+00> : vector<8x32xf32>
    %28 = tpu.matmul %27, %26, %cst_15 {dimension_numbers = #tpu.dot_dimension_numbers<[1], [0], [0], [1], [0, 0, 1, 1], [], []>} : vector<8x24xf32>, vector<24x32xf32>, vector<8x32xf32> -> vector<8x32xf32>
    %c0_16 = arith.constant 0 : index
    %c0_17 = arith.constant 0 : index
    %29 = vector.load %arg7[%c0_16, %c0_17] : memref<8x1xf32, #tpu.memory_space<vmem>>, vector<8x1xf32>
    %30 = vector.broadcast %29 : vector<8x1xf32> to vector<8x32xf32>
    %31 = arith.addf %28, %30 : vector<8x32xf32>
    %32 = arith.addf %14, %31 : vector<8x32xf32>
    %c0_18 = arith.constant 0 : index
    %c0_19 = arith.constant 0 : index
    %33 = vector.load %arg23[%c0_18, %c0_19] : memref<8x32xf32, #tpu.memory_space<vmem>>, vector<8x32xf32>
    tpu.vector_store %arg23[%c0_18, %c0_19], %32 {strides = array<i32>} : memref<8x32xf32, #tpu.memory_space<vmem>>, vector<8x32xf32>,
    %c1_i32_20 = arith.constant 1 : i32
    %34 = tpu.dynamic_rotate %32 by %c1_i32_20 dim 1 : vector<8x32xf32>, i32 -> vector<8x32xf32>
    %35 = vector.broadcast %0 : vector<1x32xf32> to vector<8x32xf32>
    %36 = arith.mulf %34, %35 : vector<8x32xf32>
    %c31_i32_21 = arith.constant 31 : i32
    %37 = tpu.dynamic_rotate %32 by %c31_i32_21 dim 1 : vector<8x32xf32>, i32 -> vector<8x32xf32>
    %38 = vector.broadcast %1 : vector<1x32xf32> to vector<8x32xf32>
    %39 = arith.mulf %37, %38 : vector<8x32xf32>
    %40 = tpu.concatenate %36, %32, %39 in 0 : vector<8x32xf32>, vector<8x32xf32>, vector<8x32xf32> -> vector<24x32xf32>
    %c0_22 = arith.constant 0 : index
    %c0_23 = arith.constant 0 : index
    %41 = vector.load %arg8[%c0_22, %c0_23] : memref<16x24xf32, #tpu.memory_space<vmem>>, vector<16x24xf32>
    %cst_24 = arith.constant dense<0.000000e+00> : vector<16x32xf32>
    %42 = tpu.matmul %41, %40, %cst_24 {dimension_numbers = #tpu.dot_dimension_numbers<[1], [0], [0], [1], [0, 0, 1, 1], [], []>} : vector<16x24xf32>, vector<24x32xf32>, vector<16x32xf32> -> vector<16x32xf32>
    %c0_25 = arith.constant 0 : index
    %c0_26 = arith.constant 0 : index
    %43 = vector.load %arg9[%c0_25, %c0_26] : memref<16x1xf32, #tpu.memory_space<vmem>>, vector<16x1xf32>
    %44 = vector.broadcast %43 : vector<16x1xf32> to vector<16x32xf32>
    %45 = arith.addf %42, %44 : vector<16x32xf32>
    %cst_27 = arith.constant 0.000000e+00 : f32
    %46 = vector.broadcast %cst_27 : f32 to vector<16x32xf32>
    %47 = arith.cmpf ogt, %45, %46 : vector<16x32xf32>
    %cst_28 = arith.constant 2.000000e-01 : f32
    %48 = vector.broadcast %cst_28 : f32 to vector<16x32xf32>
    %49 = arith.mulf %48, %45 : vector<16x32xf32>
    %50 = arith.select %47, %45, %49 : vector<16x32xi1>, vector<16x32xf32>
    %c1_i32_29 = arith.constant 1 : i32
    %51 = tpu.dynamic_rotate %50 by %c1_i32_29 dim 1 : vector<16x32xf32>, i32 -> vector<16x32xf32>
    %52 = vector.broadcast %0 : vector<1x32xf32> to vector<16x32xf32>
    %53 = arith.mulf %51, %52 : vector<16x32xf32>
    %c31_i32_30 = arith.constant 31 : i32
    %54 = tpu.dynamic_rotate %50 by %c31_i32_30 dim 1 : vector<16x32xf32>, i32 -> vector<16x32xf32>
    %55 = vector.broadcast %1 : vector<1x32xf32> to vector<16x32xf32>
    %56 = arith.mulf %54, %55 : vector<16x32xf32>
    %57 = tpu.concatenate %53, %50, %56 in 0 : vector<16x32xf32>, vector<16x32xf32>, vector<16x32xf32> -> vector<48x32xf32>
    %c0_31 = arith.constant 0 : index
    %c0_32 = arith.constant 0 : index
    %58 = vector.load %arg10[%c0_31, %c0_32] : memref<16x48xf32, #tpu.memory_space<vmem>>, vector<16x48xf32>
    %cst_33 = arith.constant dense<0.000000e+00> : vector<16x32xf32>
    %59 = tpu.matmul %58, %57, %cst_33 {dimension_numbers = #tpu.dot_dimension_numbers<[1], [0], [0], [1], [0, 0, 1, 1], [], []>} : vector<16x48xf32>, vector<48x32xf32>, vector<16x32xf32> -> vector<16x32xf32>
    %c0_34 = arith.constant 0 : index
    %c0_35 = arith.constant 0 : index
    %60 = vector.load %arg11[%c0_34, %c0_35] : memref<16x1xf32, #tpu.memory_space<vmem>>, vector<16x1xf32>
    %61 = vector.broadcast %60 : vector<16x1xf32> to vector<16x32xf32>
    %62 = arith.addf %59, %61 : vector<16x32xf32>
    %63 = arith.addf %45, %62 : vector<16x32xf32>
    %c0_36 = arith.constant 0 : index
    %c0_37 = arith.constant 0 : index
    %64 = vector.load %arg24[%c0_36, %c0_37] : memref<16x32xf32, #tpu.memory_space<vmem>>, vector<16x32xf32>
    tpu.vector_store %arg24[%c0_36, %c0_37], %63 {strides = array<i32>} : memref<16x32xf32, #tpu.memory_space<vmem>>, vector<16x32xf32>,
    %c1_i32_38 = arith.constant 1 : i32
    %65 = tpu.dynamic_rotate %63 by %c1_i32_38 dim 1 : vector<16x32xf32>, i32 -> vector<16x32xf32>
    %66 = vector.broadcast %0 : vector<1x32xf32> to vector<16x32xf32>
    %67 = arith.mulf %65, %66 : vector<16x32xf32>
    %c31_i32_39 = arith.constant 31 : i32
    %68 = tpu.dynamic_rotate %63 by %c31_i32_39 dim 1 : vector<16x32xf32>, i32 -> vector<16x32xf32>
    %69 = vector.broadcast %1 : vector<1x32xf32> to vector<16x32xf32>
    %70 = arith.mulf %68, %69 : vector<16x32xf32>
    %71 = tpu.concatenate %67, %63, %70 in 0 : vector<16x32xf32>, vector<16x32xf32>, vector<16x32xf32> -> vector<48x32xf32>
    %c0_40 = arith.constant 0 : index
    %c0_41 = arith.constant 0 : index
    %72 = vector.load %arg12[%c0_40, %c0_41] : memref<32x48xf32, #tpu.memory_space<vmem>>, vector<32x48xf32>
    %cst_42 = arith.constant dense<0.000000e+00> : vector<32x32xf32>
    %73 = tpu.matmul %72, %71, %cst_42 {dimension_numbers = #tpu.dot_dimension_numbers<[1], [0], [0], [1], [0, 0, 1, 1], [], []>} : vector<32x48xf32>, vector<48x32xf32>, vector<32x32xf32> -> vector<32x32xf32>
    %c0_43 = arith.constant 0 : index
    %c0_44 = arith.constant 0 : index
    %74 = vector.load %arg13[%c0_43, %c0_44] : memref<32x1xf32, #tpu.memory_space<vmem>>, vector<32x1xf32>
    %75 = vector.broadcast %74 : vector<32x1xf32> to vector<32x32xf32>
    %76 = arith.addf %73, %75 : vector<32x32xf32>
    %cst_45 = arith.constant 0.000000e+00 : f32
    %77 = vector.broadcast %cst_45 : f32 to vector<32x32xf32>
    %78 = arith.cmpf ogt, %76, %77 : vector<32x32xf32>
    %cst_46 = arith.constant 2.000000e-01 : f32
    %79 = vector.broadcast %cst_46 : f32 to vector<32x32xf32>
    %80 = arith.mulf %79, %76 : vector<32x32xf32>
    %81 = arith.select %78, %76, %80 : vector<32x32xi1>, vector<32x32xf32>
    %c1_i32_47 = arith.constant 1 : i32
    %82 = tpu.dynamic_rotate %81 by %c1_i32_47 dim 1 : vector<32x32xf32>, i32 -> vector<32x32xf32>
    %83 = vector.broadcast %0 : vector<1x32xf32> to vector<32x32xf32>
    %84 = arith.mulf %82, %83 : vector<32x32xf32>
    %c31_i32_48 = arith.constant 31 : i32
    %85 = tpu.dynamic_rotate %81 by %c31_i32_48 dim 1 : vector<32x32xf32>, i32 -> vector<32x32xf32>
    %86 = vector.broadcast %1 : vector<1x32xf32> to vector<32x32xf32>
    %87 = arith.mulf %85, %86 : vector<32x32xf32>
    %88 = tpu.concatenate %84, %81, %87 in 0 : vector<32x32xf32>, vector<32x32xf32>, vector<32x32xf32> -> vector<96x32xf32>
    %c0_49 = arith.constant 0 : index
    %c0_50 = arith.constant 0 : index
    %89 = vector.load %arg14[%c0_49, %c0_50] : memref<32x96xf32, #tpu.memory_space<vmem>>, vector<32x96xf32>
    %cst_51 = arith.constant dense<0.000000e+00> : vector<32x32xf32>
    %90 = tpu.matmul %89, %88, %cst_51 {dimension_numbers = #tpu.dot_dimension_numbers<[1], [0], [0], [1], [0, 0, 1, 1], [], []>} : vector<32x96xf32>, vector<96x32xf32>, vector<32x32xf32> -> vector<32x32xf32>
    %c0_52 = arith.constant 0 : index
    %c0_53 = arith.constant 0 : index
    %91 = vector.load %arg15[%c0_52, %c0_53] : memref<32x1xf32, #tpu.memory_space<vmem>>, vector<32x1xf32>
    %92 = vector.broadcast %91 : vector<32x1xf32> to vector<32x32xf32>
    %93 = arith.addf %90, %92 : vector<32x32xf32>
    %94 = arith.addf %76, %93 : vector<32x32xf32>
    %c0_54 = arith.constant 0 : index
    %c0_55 = arith.constant 0 : index
    %95 = vector.load %arg25[%c0_54, %c0_55] : memref<32x32xf32, #tpu.memory_space<vmem>>, vector<32x32xf32>
    tpu.vector_store %arg25[%c0_54, %c0_55], %94 {strides = array<i32>} : memref<32x32xf32, #tpu.memory_space<vmem>>, vector<32x32xf32>,
    %c1_i32_56 = arith.constant 1 : i32
    %96 = tpu.dynamic_rotate %94 by %c1_i32_56 dim 1 : vector<32x32xf32>, i32 -> vector<32x32xf32>
    %97 = vector.broadcast %0 : vector<1x32xf32> to vector<32x32xf32>
    %98 = arith.mulf %96, %97 : vector<32x32xf32>
    %c31_i32_57 = arith.constant 31 : i32
    %99 = tpu.dynamic_rotate %94 by %c31_i32_57 dim 1 : vector<32x32xf32>, i32 -> vector<32x32xf32>
    %100 = vector.broadcast %1 : vector<1x32xf32> to vector<32x32xf32>
    %101 = arith.mulf %99, %100 : vector<32x32xf32>
    %102 = tpu.concatenate %98, %94, %101 in 0 : vector<32x32xf32>, vector<32x32xf32>, vector<32x32xf32> -> vector<96x32xf32>
    %c0_58 = arith.constant 0 : index
    %c0_59 = arith.constant 0 : index
    %103 = vector.load %arg16[%c0_58, %c0_59] : memref<64x96xf32, #tpu.memory_space<vmem>>, vector<64x96xf32>
    %cst_60 = arith.constant dense<0.000000e+00> : vector<64x32xf32>
    %104 = tpu.matmul %103, %102, %cst_60 {dimension_numbers = #tpu.dot_dimension_numbers<[1], [0], [0], [1], [0, 0, 1, 1], [], []>} : vector<64x96xf32>, vector<96x32xf32>, vector<64x32xf32> -> vector<64x32xf32>
    %c0_61 = arith.constant 0 : index
    %c0_62 = arith.constant 0 : index
    %105 = vector.load %arg17[%c0_61, %c0_62] : memref<64x1xf32, #tpu.memory_space<vmem>>, vector<64x1xf32>
    %106 = vector.broadcast %105 : vector<64x1xf32> to vector<64x32xf32>
    %107 = arith.addf %104, %106 : vector<64x32xf32>
    %cst_63 = arith.constant 0.000000e+00 : f32
    %108 = vector.broadcast %cst_63 : f32 to vector<64x32xf32>
    %109 = arith.cmpf ogt, %107, %108 : vector<64x32xf32>
    %cst_64 = arith.constant 2.000000e-01 : f32
    %110 = vector.broadcast %cst_64 : f32 to vector<64x32xf32>
    %111 = arith.mulf %110, %107 : vector<64x32xf32>
    %112 = arith.select %109, %107, %111 : vector<64x32xi1>, vector<64x32xf32>
    %c1_i32_65 = arith.constant 1 : i32
    %113 = tpu.dynamic_rotate %112 by %c1_i32_65 dim 1 : vector<64x32xf32>, i32 -> vector<64x32xf32>
    %114 = vector.broadcast %0 : vector<1x32xf32> to vector<64x32xf32>
    %115 = arith.mulf %113, %114 : vector<64x32xf32>
    %c31_i32_66 = arith.constant 31 : i32
    %116 = tpu.dynamic_rotate %112 by %c31_i32_66 dim 1 : vector<64x32xf32>, i32 -> vector<64x32xf32>
    %117 = vector.broadcast %1 : vector<1x32xf32> to vector<64x32xf32>
    %118 = arith.mulf %116, %117 : vector<64x32xf32>
    %119 = tpu.concatenate %115, %112, %118 in 0 : vector<64x32xf32>, vector<64x32xf32>, vector<64x32xf32> -> vector<192x32xf32>
    %c0_67 = arith.constant 0 : index
    %c0_68 = arith.constant 0 : index
    %120 = vector.load %arg18[%c0_67, %c0_68] : memref<64x192xf32, #tpu.memory_space<vmem>>, vector<64x192xf32>
    %cst_69 = arith.constant dense<0.000000e+00> : vector<64x32xf32>
    %121 = tpu.matmul %120, %119, %cst_69 {dimension_numbers = #tpu.dot_dimension_numbers<[1], [0], [0], [1], [0, 0, 1, 1], [], []>} : vector<64x192xf32>, vector<192x32xf32>, vector<64x32xf32> -> vector<64x32xf32>
    %c0_70 = arith.constant 0 : index
    %c0_71 = arith.constant 0 : index
    %122 = vector.load %arg19[%c0_70, %c0_71] : memref<64x1xf32, #tpu.memory_space<vmem>>, vector<64x1xf32>
    %123 = vector.broadcast %122 : vector<64x1xf32> to vector<64x32xf32>
    %124 = arith.addf %121, %123 : vector<64x32xf32>
    %125 = arith.addf %107, %124 : vector<64x32xf32>
    %c0_72 = arith.constant 0 : index
    %c0_73 = arith.constant 0 : index
    %126 = vector.load %arg26[%c0_72, %c0_73] : memref<64x32xf32, #tpu.memory_space<vmem>>, vector<64x32xf32>
    tpu.vector_store %arg26[%c0_72, %c0_73], %125 {strides = array<i32>} : memref<64x32xf32, #tpu.memory_space<vmem>>, vector<64x32xf32>,
    %c0_74 = arith.constant 0 : index
    %c0_75 = arith.constant 0 : index
    %127 = vector.load %arg20[%c0_74, %c0_75] : memref<64x32xf32, #tpu.memory_space<vmem>>, vector<64x32xf32>
    %128 = arith.mulf %125, %127 : vector<64x32xf32>
    %cst_76 = arith.constant dense<0.000000e+00> : vector<32xf32>
    %129 = vector.multi_reduction <add>, %128, %cst_76 [0] : vector<64x32xf32> to vector<32xf32>
    %130 = vector.shape_cast %129 : vector<32xf32> to vector<1x32xf32>
    %c0_77 = arith.constant 0 : index
    %c0_78 = arith.constant 0 : index
    %131 = vector.load %arg21[%c0_77, %c0_78] : memref<32x2xf32, #tpu.memory_space<vmem>>, vector<32x2xf32>
    %cst_79 = arith.constant dense<0.000000e+00> : vector<1x2xf32>
    %132 = tpu.matmul %130, %131, %cst_79 {dimension_numbers = #tpu.dot_dimension_numbers<[1], [0], [0], [1], [0, 0, 1, 1], [], []>} : vector<1x32xf32>, vector<32x2xf32>, vector<1x2xf32> -> vector<1x2xf32>
    %c0_80 = arith.constant 0 : index
    %c0_81 = arith.constant 0 : index
    %133 = vector.load %arg22[%c0_80, %c0_81] : memref<1x1xf32, #tpu.memory_space<vmem>>, vector<1x1xf32>
    %134 = vector.broadcast %133 : vector<1x1xf32> to vector<1x2xf32>
    %135 = arith.addf %132, %134 : vector<1x2xf32>
    %c0_82 = arith.constant 0 : index
    %c0_83 = arith.constant 0 : index
    %c0_84 = arith.constant 0 : index
    %136 = vector.load %arg27[%c0_82, %c0_83, %c0_84] : memref<1x1x2xf32, #tpu.memory_space<vmem>>, vector<1x1x2xf32>
    %137 = vector.shape_cast %136 : vector<1x1x2xf32> to vector<1x2xf32>
    %138 = vector.shape_cast %135 : vector<1x2xf32> to vector<1x1x2xf32>
    tpu.vector_store %arg27[%c0_82, %c0_83, %c0_84], %138 {strides = array<i32>} : memref<1x1x2xf32, #tpu.memory_space<vmem>>, vector<1x1x2xf32>,
    return
  }
  func.func @transform_0(%arg0: i32) -> (i32, i32) {
    %c0_i32 = arith.constant 0 : i32
    %c0_i32_0 = arith.constant 0 : i32
    return %c0_i32, %arg0 : i32, i32
  }
  func.func @transform_1(%arg0: i32) -> (i32, i32) {
    %c0_i32 = arith.constant 0 : i32
    %c0_i32_0 = arith.constant 0 : i32
    %c0_i32_1 = arith.constant 0 : i32
    return %c0_i32, %c0_i32_0 : i32, i32
  }
  func.func @transform_2(%arg0: i32) -> (i32, i32) {
    %c0_i32 = arith.constant 0 : i32
    %c0_i32_0 = arith.constant 0 : i32
    %c0_i32_1 = arith.constant 0 : i32
    return %c0_i32, %c0_i32_0 : i32, i32
  }
  func.func @transform_3(%arg0: i32) -> (i32, i32) {
    %c0_i32 = arith.constant 0 : i32
    %c0_i32_0 = arith.constant 0 : i32
    %c0_i32_1 = arith.constant 0 : i32
    return %c0_i32, %c0_i32_0 : i32, i32
  }
  func.func @transform_4(%arg0: i32) -> (i32, i32) {
    %c0_i32 = arith.constant 0 : i32
    %c0_i32_0 = arith.constant 0 : i32
    %c0_i32_1 = arith.constant 0 : i32
    return %c0_i32, %c0_i32_0 : i32, i32
  }
  func.func @transform_5(%arg0: i32) -> (i32, i32) {
    %c0_i32 = arith.constant 0 : i32
    %c0_i32_0 = arith.constant 0 : i32
    %c0_i32_1 = arith.constant 0 : i32
    return %c0_i32, %c0_i32_0 : i32, i32
  }
  func.func @transform_6(%arg0: i32) -> (i32, i32) {
    %c0_i32 = arith.constant 0 : i32
    %c0_i32_0 = arith.constant 0 : i32
    %c0_i32_1 = arith.constant 0 : i32
    return %c0_i32, %c0_i32_0 : i32, i32
  }
  func.func @transform_7(%arg0: i32) -> (i32, i32) {
    %c0_i32 = arith.constant 0 : i32
    %c0_i32_0 = arith.constant 0 : i32
    %c0_i32_1 = arith.constant 0 : i32
    return %c0_i32, %c0_i32_0 : i32, i32
  }
  func.func @transform_8(%arg0: i32) -> (i32, i32) {
    %c0_i32 = arith.constant 0 : i32
    %c0_i32_0 = arith.constant 0 : i32
    %c0_i32_1 = arith.constant 0 : i32
    return %c0_i32, %c0_i32_0 : i32, i32
  }
  func.func @transform_9(%arg0: i32) -> (i32, i32) {
    %c0_i32 = arith.constant 0 : i32
    %c0_i32_0 = arith.constant 0 : i32
    %c0_i32_1 = arith.constant 0 : i32
    return %c0_i32, %c0_i32_0 : i32, i32
  }
  func.func @transform_10(%arg0: i32) -> (i32, i32) {
    %c0_i32 = arith.constant 0 : i32
    %c0_i32_0 = arith.constant 0 : i32
    %c0_i32_1 = arith.constant 0 : i32
    return %c0_i32, %c0_i32_0 : i32, i32
  }
  func.func @transform_11(%arg0: i32) -> (i32, i32) {
    %c0_i32 = arith.constant 0 : i32
    %c0_i32_0 = arith.constant 0 : i32
    %c0_i32_1 = arith.constant 0 : i32
    return %c0_i32, %c0_i32_0 : i32, i32
  }
  func.func @transform_12(%arg0: i32) -> (i32, i32) {
    %c0_i32 = arith.constant 0 : i32
    %c0_i32_0 = arith.constant 0 : i32
    %c0_i32_1 = arith.constant 0 : i32
    return %c0_i32, %c0_i32_0 : i32, i32
  }
  func.func @transform_13(%arg0: i32) -> (i32, i32) {
    %c0_i32 = arith.constant 0 : i32
    %c0_i32_0 = arith.constant 0 : i32
    %c0_i32_1 = arith.constant 0 : i32
    return %c0_i32, %c0_i32_0 : i32, i32
  }
  func.func @transform_14(%arg0: i32) -> (i32, i32) {
    %c0_i32 = arith.constant 0 : i32
    %c0_i32_0 = arith.constant 0 : i32
    %c0_i32_1 = arith.constant 0 : i32
    return %c0_i32, %c0_i32_0 : i32, i32
  }
  func.func @transform_15(%arg0: i32) -> (i32, i32) {
    %c0_i32 = arith.constant 0 : i32
    %c0_i32_0 = arith.constant 0 : i32
    %c0_i32_1 = arith.constant 0 : i32
    return %c0_i32, %c0_i32_0 : i32, i32
  }
  func.func @transform_16(%arg0: i32) -> (i32, i32) {
    %c0_i32 = arith.constant 0 : i32
    %c0_i32_0 = arith.constant 0 : i32
    %c0_i32_1 = arith.constant 0 : i32
    return %c0_i32, %c0_i32_0 : i32, i32
  }
  func.func @transform_17(%arg0: i32) -> (i32, i32) {
    %c0_i32 = arith.constant 0 : i32
    %c0_i32_0 = arith.constant 0 : i32
    %c0_i32_1 = arith.constant 0 : i32
    return %c0_i32, %c0_i32_0 : i32, i32
  }
  func.func @transform_18(%arg0: i32) -> (i32, i32) {
    %c0_i32 = arith.constant 0 : i32
    %c0_i32_0 = arith.constant 0 : i32
    %c0_i32_1 = arith.constant 0 : i32
    return %c0_i32, %c0_i32_0 : i32, i32
  }
  func.func @transform_19(%arg0: i32) -> (i32, i32) {
    %c0_i32 = arith.constant 0 : i32
    %c0_i32_0 = arith.constant 0 : i32
    %c0_i32_1 = arith.constant 0 : i32
    return %c0_i32, %c0_i32_0 : i32, i32
  }
  func.func @transform_20(%arg0: i32) -> (i32, i32) {
    %c0_i32 = arith.constant 0 : i32
    %c0_i32_0 = arith.constant 0 : i32
    %c0_i32_1 = arith.constant 0 : i32
    return %c0_i32, %c0_i32_0 : i32, i32
  }
  func.func @transform_21(%arg0: i32) -> (i32, i32) {
    %c0_i32 = arith.constant 0 : i32
    %c0_i32_0 = arith.constant 0 : i32
    %c0_i32_1 = arith.constant 0 : i32
    return %c0_i32, %c0_i32_0 : i32, i32
  }
  func.func @transform_22(%arg0: i32) -> (i32, i32) {
    %c0_i32 = arith.constant 0 : i32
    %c0_i32_0 = arith.constant 0 : i32
    return %c0_i32, %arg0 : i32, i32
  }
  func.func @transform_23(%arg0: i32) -> (i32, i32) {
    %c0_i32 = arith.constant 0 : i32
    %c0_i32_0 = arith.constant 0 : i32
    return %c0_i32, %arg0 : i32, i32
  }
  func.func @transform_24(%arg0: i32) -> (i32, i32) {
    %c0_i32 = arith.constant 0 : i32
    %c0_i32_0 = arith.constant 0 : i32
    return %c0_i32, %arg0 : i32, i32
  }
  func.func @transform_25(%arg0: i32) -> (i32, i32) {
    %c0_i32 = arith.constant 0 : i32
    %c0_i32_0 = arith.constant 0 : i32
    return %c0_i32, %arg0 : i32, i32
  }
  func.func @transform_26(%arg0: i32) -> (i32, i32, i32) {
    %c0_i32 = arith.constant 0 : i32
    %c0_i32_0 = arith.constant 0 : i32
    %c0_i32_1 = arith.constant 0 : i32
    return %arg0, %c0_i32, %c0_i32_0 : i32, i32, i32
  }
}

</mosaic_0001>

<llo_original>
// kernel: tpu_custom_call.1
$region0: #{tpu_custom_call.1}
  #allocation0 [shape = 'u32[]', space=smem, size = 0x4, offset = 0x4, fixed_abs, tag = 'smem constant byte address 0x4 - core index']
  #allocation1 [shape = 'u32[144,128]{1,0:T(1,128)}', space=vmem, size = 0x12000, scoped, tag = 'internal scratch']
  #allocation2 [shape = 'f32[1,1]{1,0:T(1,128)S(1)}', space=vmem, size = 0x200, scoped, tag = 'scoped memory for tpu_custom_call.1']
  %s0 = inlined_call_operand.vmem [shape: f32[4,32], index: 0, kind: input, shape index: {}]
  %s1 = inlined_call_operand.vmem [shape: f32[1,32], index: 1, kind: input, shape index: {}]
  %s2 = inlined_call_operand.vmem [shape: f32[1,32], index: 2, kind: input, shape index: {}]
  %s3 = inlined_call_operand.vmem [shape: f32[8,12], index: 3, kind: input, shape index: {}]
  %s4 = inlined_call_operand.vmem [shape: f32[8,1], index: 4, kind: input, shape index: {}]
  %s5 = inlined_call_operand.vmem [shape: f32[8,24], index: 5, kind: input, shape index: {}]
  %s6 = inlined_call_operand.vmem [shape: f32[8,1], index: 6, kind: input, shape index: {}]
  %s7 = inlined_call_operand.vmem [shape: f32[16,24], index: 7, kind: input, shape index: {}]
  %s8 = inlined_call_operand.vmem [shape: f32[16,1], index: 8, kind: input, shape index: {}]
  %s9 = inlined_call_operand.vmem [shape: f32[16,48], index: 9, kind: input, shape index: {}]
  %s10 = inlined_call_operand.vmem [shape: f32[16,1], index: 10, kind: input, shape index: {}]
  %s11 = inlined_call_operand.vmem [shape: f32[32,48], index: 11, kind: input, shape index: {}]
  %s12 = inlined_call_operand.vmem [shape: f32[32,1], index: 12, kind: input, shape index: {}]
  %s13 = inlined_call_operand.vmem [shape: f32[32,96], index: 13, kind: input, shape index: {}]
  %s14 = inlined_call_operand.vmem [shape: f32[32,1], index: 14, kind: input, shape index: {}]
  %s15 = inlined_call_operand.vmem [shape: f32[64,96], index: 15, kind: input, shape index: {}]
  %s16 = inlined_call_operand.vmem [shape: f32[64,1], index: 16, kind: input, shape index: {}]
  %s17 = inlined_call_operand.vmem [shape: f32[64,192], index: 17, kind: input, shape index: {}]
  %s18 = inlined_call_operand.vmem [shape: f32[64,1], index: 18, kind: input, shape index: {}]
  %s19 = inlined_call_operand.vmem [shape: f32[64,32], index: 19, kind: input, shape index: {}]
  %s20 = inlined_call_operand.vmem [shape: f32[32,2], index: 20, kind: input, shape index: {}]
  %s21 = inlined_call_operand.<no memory space> [shape: f32[1,1], index: 21, kind: input, shape index: {}]
  %s22 = inlined_call_operand.hbm [shape: f32[8,32], index: 22, kind: output, shape index: {0}]
  %s23 = inlined_call_operand.hbm [shape: f32[16,32], index: 23, kind: output, shape index: {1}]
  %s24 = inlined_call_operand.hbm [shape: f32[32,32], index: 24, kind: output, shape index: {2}]
  %s25 = inlined_call_operand.vmem [shape: f32[64,32], index: 25, kind: output, shape index: {3}]
  %s26 = inlined_call_operand.hbm [shape: f32[1,1,2], index: 26, kind: output, shape index: {4}]
  %27 = xla_tuple %s22, %s23, %s24, %s25, %s26
  %s28 = sld [smem:[#allocation0]]
  $region130: #{tpu_custom_call.1} parent=0
    _
  %s30 = ssub.s32 1, %s28
  %s31 = scalar_select 0, %s30, %s28
  %v32 = vstv %s21
  %33 = vst [vmem:[#allocation2] sm:$0x1] %v32
  $region1: #{tpu_custom_call.1} parent=0
    #allocation3 [shape = 'u8[4096]{0}', space=vmem, size = 0x1000, scoped, tag = 'output window, operand 0, single buffered']
    #allocation4 [shape = 's32[1]{0}', space=sflag, size = 0x4, scoped, tag = 'scoped memory for tpu_custom_call.1']
    #allocation5 [shape = 'u8[8192]{0}', space=vmem, size = 0x2000, scoped, tag = 'output window, operand 1, single buffered']
    #allocation6 [shape = 's32[1]{0}', space=sflag, size = 0x4, scoped, tag = 'scoped memory for tpu_custom_call.1']
    #allocation7 [shape = 'u8[16384]{0}', space=vmem, size = 0x4000, scoped, tag = 'output window, operand 2, single buffered']
    #allocation8 [shape = 'u8[512]{0}', space=vmem, size = 0x400, scoped, tag = 'output window, operand 4, single buffered']
    #allocation9 [shape = 's32[1]{0}', space=sflag, size = 0x4, scoped, tag = 'scoped memory for tpu_custom_call.1']
    %34 = vsyncpa [#allocation4], 0
    %35 = vsyncpa [#allocation6], 0
    %36 = vsyncpa [#allocation9], 0
    // Predicated region
    $region2: #{tpu_custom_call.1} parent=1 // pred_check
      _
    $region3: #{tpu_custom_call.1} parent=1 // pred_check_branch
      %38 = sbr.rel (0) target = $region5
    $region4: #{tpu_custom_call.1} parent=1 // pred_region
      _
    $region5: #{tpu_custom_call.1} parent=1 // pred_fallthru
      _
    // Predicated region
    $region6: #{tpu_custom_call.1} parent=1 // pred_check
      _
    $region7: #{tpu_custom_call.1} parent=1 // pred_check_branch
      %40 = sbr.rel (0) target = $region9
    $region8: #{tpu_custom_call.1} parent=1 // pred_region
      _
    $region9: #{tpu_custom_call.1} parent=1 // pred_fallthru
      _
    // Predicated region
    $region10: #{tpu_custom_call.1} parent=1 // pred_check
      _
    $region11: #{tpu_custom_call.1} parent=1 // pred_check_branch
      %42 = sbr.rel (0) target = $region13
    $region12: #{tpu_custom_call.1} parent=1 // pred_region
      _
    $region13: #{tpu_custom_call.1} parent=1 // pred_fallthru
      _
    // Predicated region
    $region14: #{tpu_custom_call.1} parent=1 // pred_check
      _
    $region15: #{tpu_custom_call.1} parent=1 // pred_check_branch
      %44 = sbr.rel (0) target = $region17
    $region16: #{tpu_custom_call.1} parent=1 // pred_region
      _
    $region17: #{tpu_custom_call.1} parent=1 // pred_fallthru
      _
    // Predicated region
    $region18: #{tpu_custom_call.1} parent=1 // pred_check
      _
    $region19: #{tpu_custom_call.1} parent=1 // pred_check_branch
      %46 = sbr.rel (0) target = $region21
    $region20: #{tpu_custom_call.1} parent=1 // pred_region
      _
    $region21: #{tpu_custom_call.1} parent=1 // pred_fallthru
      _
    // Predicated region
    $region22: #{tpu_custom_call.1} parent=1 // pred_check
      _
    $region23: #{tpu_custom_call.1} parent=1 // pred_check_branch
      %48 = sbr.rel (0) target = $region25
    $region24: #{tpu_custom_call.1} parent=1 // pred_region
      _
    $region25: #{tpu_custom_call.1} parent=1 // pred_fallthru
      _
    // Predicated region
    $region26: #{tpu_custom_call.1} parent=1 // pred_check
      _
    $region27: #{tpu_custom_call.1} parent=1 // pred_check_branch
      %50 = sbr.rel (0) target = $region29
    $region28: #{tpu_custom_call.1} parent=1 // pred_region
      _
    $region29: #{tpu_custom_call.1} parent=1 // pred_fallthru
      _
    // Predicated region
    $region30: #{tpu_custom_call.1} parent=1 // pred_check
      _
    $region31: #{tpu_custom_call.1} parent=1 // pred_check_branch
      %52 = sbr.rel (0) target = $region33
    $region32: #{tpu_custom_call.1} parent=1 // pred_region
      _
    $region33: #{tpu_custom_call.1} parent=1 // pred_fallthru
      _
    // Predicated region
    $region34: #{tpu_custom_call.1} parent=1 // pred_check
      _
    $region35: #{tpu_custom_call.1} parent=1 // pred_check_branch
      %54 = sbr.rel (0) target = $region37
    $region36: #{tpu_custom_call.1} parent=1 // pred_region
      _
    $region37: #{tpu_custom_call.1} parent=1 // pred_fallthru
      _
    // Predicated region
    $region38: #{tpu_custom_call.1} parent=1 // pred_check
      _
    $region39: #{tpu_custom_call.1} parent=1 // pred_check_branch
      %56 = sbr.rel (0) target = $region41
    $region40: #{tpu_custom_call.1} parent=1 // pred_region
      _
    $region41: #{tpu_custom_call.1} parent=1 // pred_fallthru
      _
    // Predicated region
    $region42: #{tpu_custom_call.1} parent=1 // pred_check
      _
    $region43: #{tpu_custom_call.1} parent=1 // pred_check_branch
      %58 = sbr.rel (0) target = $region45
    $region44: #{tpu_custom_call.1} parent=1 // pred_region
      _
    $region45: #{tpu_custom_call.1} parent=1 // pred_fallthru
      _
    // Predicated region
    $region46: #{tpu_custom_call.1} parent=1 // pred_check
      _
    $region47: #{tpu_custom_call.1} parent=1 // pred_check_branch
      %60 = sbr.rel (0) target = $region49
    $region48: #{tpu_custom_call.1} parent=1 // pred_region
      _
    $region49: #{tpu_custom_call.1} parent=1 // pred_fallthru
      _
    // Predicated region
    $region50: #{tpu_custom_call.1} parent=1 // pred_check
      _
    $region51: #{tpu_custom_call.1} parent=1 // pred_check_branch
      %62 = sbr.rel (0) target = $region53
    $region52: #{tpu_custom_call.1} parent=1 // pred_region
      _
    $region53: #{tpu_custom_call.1} parent=1 // pred_fallthru
      _
    // Predicated region
    $region54: #{tpu_custom_call.1} parent=1 // pred_check
      _
    $region55: #{tpu_custom_call.1} parent=1 // pred_check_branch
      %64 = sbr.rel (0) target = $region57
    $region56: #{tpu_custom_call.1} parent=1 // pred_region
      _
    $region57: #{tpu_custom_call.1} parent=1 // pred_fallthru
      _
    // Predicated region
    $region58: #{tpu_custom_call.1} parent=1 // pred_check
      _
    $region59: #{tpu_custom_call.1} parent=1 // pred_check_branch
      %66 = sbr.rel (0) target = $region61
    $region60: #{tpu_custom_call.1} parent=1 // pred_region
      _
    $region61: #{tpu_custom_call.1} parent=1 // pred_fallthru
      _
    // Predicated region
    $region62: #{tpu_custom_call.1} parent=1 // pred_check
      _
    $region63: #{tpu_custom_call.1} parent=1 // pred_check_branch
      %68 = sbr.rel (0) target = $region65
    $region64: #{tpu_custom_call.1} parent=1 // pred_region
      _
    $region65: #{tpu_custom_call.1} parent=1 // pred_fallthru
      _
    // Predicated region
    $region66: #{tpu_custom_call.1} parent=1 // pred_check
      _
    $region67: #{tpu_custom_call.1} parent=1 // pred_check_branch
      %70 = sbr.rel (0) target = $region69
    $region68: #{tpu_custom_call.1} parent=1 // pred_region
      _
    $region69: #{tpu_custom_call.1} parent=1 // pred_fallthru
      _
    // Predicated region
    $region70: #{tpu_custom_call.1} parent=1 // pred_check
      _
    $region71: #{tpu_custom_call.1} parent=1 // pred_check_branch
      %72 = sbr.rel (0) target = $region73
    $region72: #{tpu_custom_call.1} parent=1 // pred_region
      _
    $region73: #{tpu_custom_call.1} parent=1 // pred_fallthru
      _
    // Predicated region
    $region74: #{tpu_custom_call.1} parent=1 // pred_check
      _
    $region75: #{tpu_custom_call.1} parent=1 // pred_check_branch
      %74 = sbr.rel (0) target = $region77
    $region76: #{tpu_custom_call.1} parent=1 // pred_region
      _
    $region77: #{tpu_custom_call.1} parent=1 // pred_fallthru
      _
    // Predicated region
    $region78: #{tpu_custom_call.1} parent=1 // pred_check
      _
    $region79: #{tpu_custom_call.1} parent=1 // pred_check_branch
      %76 = sbr.rel (0) target = $region81
    $region80: #{tpu_custom_call.1} parent=1 // pred_region
      _
    $region81: #{tpu_custom_call.1} parent=1 // pred_fallthru
      _
    // Predicated region
    $region82: #{tpu_custom_call.1} parent=1 // pred_check
      _
    $region83: #{tpu_custom_call.1} parent=1 // pred_check_branch
      %78 = sbr.rel (0) target = $region85
    $region84: #{tpu_custom_call.1} parent=1 // pred_region
      _
    $region85: #{tpu_custom_call.1} parent=1 // pred_fallthru
      _
    // Predicated region
    $region86: #{tpu_custom_call.1} parent=1 // pred_check
      _
    $region87: #{tpu_custom_call.1} parent=1 // pred_check_branch
      %80 = sbr.rel (0) target = $region89
    $region88: #{tpu_custom_call.1} parent=1 // pred_region
      _
    $region89: #{tpu_custom_call.1} parent=1 // pred_fallthru
      _
    %v81 = vld [vmem:[%s1] sm:$0x1]
    %v82 = vld [vmem:[%s2] sm:$0x1]
    %v83 = vld [vmem:[%s0] sm:$0xf]
    %vm84 = vcmask 1047808
    %85 = vrot.lane.b32.xlu0 %v83, 32
    %v86 = vpop.permute.xlu0 %85
    %v87 = vsel %vm84, %v86, %v83
    %88 = vrot.lane.b32.xlu0 %v87, 32
    %v89 = vpop.permute.xlu0 %88
    %v90 = vsel %vm84, %v89, %v83
    %v92 = vlaneseq
    %v93 = vshrl.u32 %v92, 7
    %v94 = vsub.s32 0, %v93
    %v95 = vrot.slane %v81, %v94
    %96 = vrot.lane.b32.xlu0 %v95, 31
    %v97 = vpop.permute.xlu0 %96
    %v99 = vmul.f32 %v90, %v97
    %v101 = vlaneseq
    %v102 = vshrl.u32 %v101, 7
    %v103 = vsub.s32 0, %v102
    %v104 = vrot.slane %v82, %v103
    %105 = vrot.lane.b32.xlu0 %v104, 1
    %v106 = vpop.permute.xlu0 %105
    %v108 = vmul.f32 %v90, %v106
    %v110 = vrot.slane %v83, 4
    %111 = vrot.lane.b32.xlu0 %v110, 31
    %v112 = vpop.permute.xlu0 %111
    %115 = vrot.lane.b32.xlu0 %v108, 30
    %v116 = vpop.permute.xlu0 %115
    %vm117 = vcmask 1043456
    %v118 = vsel %vm117, %v99, %v112
    %v119 = vld [vmem:[%s3] sm:$0xff]
    %v120 = vld [vmem:[%s4] sm:$0xff]
    %122 = vset.pattern.permute.xlu0 0
    %123 = vperm.xlu0 %122, %v120
    %v124 = vpop.permute.xlu0 %123
    %127 = vrot.lane.b32.xlu0 %v118, 97
    %v128 = vpop.permute.xlu0 %127
    %129 = vrot.lane.b32.xlu0 %v116, 97
    %v130 = vpop.permute.xlu0 %129
    %vm132 = vcmask 97280
    %v134 = vsel %vm132, %v119, 0
    %v136 = vsel %vm117, %v130, 0
    %138 = vmatprep.subr.mxu0 0.0
    %139 = vmatpush1.msra.mxu0 0.0
    %140 = vmatprep.subr.mxu0 0.0
    %141 = vmatpush1.msra.mxu0 0.0
    %142 = vmatprep.subr.mxu0 0.0
    %143 = vmatpush1.msra.mxu0 0.0
    %144 = vmatprep.subr.mxu0 0.0
    %145 = vmatpush1.msra.mxu0 0.0
    %146 = vmatprep.subr.mxu0 0.0
    %147 = vmatpush1.msra.mxu0 0.0
    %148 = vmatprep.subr.mxu0 0.0
    %149 = vmatpush1.msra.mxu0 0.0
    %150 = vmatprep.subr.mxu0 0.0
    %151 = vmatpush1.msra.mxu0 0.0
    %152 = vmatprep.subr.mxu0 0.0
    %153 = vmatpush1.msra.mxu0 0.0
    %154 = vmatprep.subr.mxu0 0.0
    %155 = vmatpush1.msra.mxu0 0.0
    %156 = vmatprep.subr.mxu0 0.0
    %157 = vmatpush1.msra.mxu0 0.0
    %158 = vmatprep.subr.mxu0 0.0
    %159 = vmatpush1.msra.mxu0 0.0
    %160 = vmatprep.subr.mxu0 0.0
    %161 = vmatpush1.msra.mxu0 0.0
    %162 = vmatprep.subr.mxu0 0.0
    %163 = vmatpush1.msra.mxu0 0.0
    %164 = vmatprep.subr.mxu0 0.0
    %165 = vmatpush1.msra.mxu0 0.0
    %166 = vmatprep.subr.mxu0 0.0
    %167 = vmatpush1.msra.mxu0 %v136
    %168 = vmatprep.subr.mxu0 0.0
    %169 = vmatpush1.msra.mxu0 %v128
    %170 = vmatprep.subr.mxu0 0.0
    %171 = vmatpush2.msra.mxu0 0.0
    %172 = vmatprep.subr.mxu0 0.0
    %173 = vmatpush2.msra.mxu0 0.0
    %174 = vmatprep.subr.mxu0 0.0
    %175 = vmatpush2.msra.mxu0 0.0
    %176 = vmatprep.subr.mxu0 0.0
    %177 = vmatpush2.msra.mxu0 0.0
    %178 = vmatprep.subr.mxu0 0.0
    %179 = vmatpush2.msra.mxu0 0.0
    %180 = vmatprep.subr.mxu0 0.0
    %181 = vmatpush2.msra.mxu0 0.0
    %182 = vmatprep.subr.mxu0 0.0
    %183 = vmatpush2.msra.mxu0 0.0
    %184 = vmatprep.subr.mxu0 0.0
    %185 = vmatpush2.msra.mxu0 0.0
    %186 = vmatprep.subr.mxu0 0.0
    %187 = vmatpush2.msra.mxu0 0.0
    %188 = vmatprep.subr.mxu0 0.0
    %189 = vmatpush2.msra.mxu0 0.0
    %190 = vmatprep.subr.mxu0 0.0
    %191 = vmatpush2.msra.mxu0 0.0
    %192 = vmatprep.subr.mxu0 0.0
    %193 = vmatpush2.msra.mxu0 0.0
    %194 = vmatprep.subr.mxu0 0.0
    %195 = vmatpush2.msra.mxu0 0.0
    %196 = vmatprep.subr.mxu0 0.0
    %197 = vmatpush2.msra.mxu0 0.0
    %198 = vmatprep.subr.mxu0 0.0
    %199 = vmatpush2.msra.mxu0 0.0
    %200 = vmatprep.subr.mxu0 0.0
    %201 = vmatpush2.msra.mxu0 0.0
    %202 = vmatprep.mubr.f32.mxu0 0.0
    %203 = vmatmul.mubr.f32.gmra.mxu0 %v134
    %v204 = vpop.f32.mrf.mxu0
    %v205 = vadd.f32 %v124, %v204
    %v206 = vpop.f32.mrf.mxu0
    %207 = vdwg.mxu0
    %vm208 = vcmp.gt.f32.partialorder %v205, 0.0
    %v209 = vmul.f32 %v205, 0.2
    %v210 = vsel %vm208, %v205, %v209
    %211 = vrot.lane.b32.xlu0 %v210, 32
    %v212 = vpop.permute.xlu0 %211
    %v213 = vsel %vm84, %v212, %v210
    %214 = vrot.lane.b32.xlu0 %v213, 32
    %v215 = vpop.permute.xlu0 %214
    %v216 = vsel %vm84, %v215, %v210
    %v217 = vmul.f32 %v216, %v97
    %v218 = vmul.f32 %v216, %v106
    %220 = vrot.lane.b32.xlu0 %v210, 31
    %v221 = vpop.permute.xlu0 %220
    %223 = vrot.lane.b32.xlu0 %v218, 30
    %v224 = vpop.permute.xlu0 %223
    %v225 = vld [vmem:[%s5] sm:$0xff]
    %v226 = vld [vmem:[%s6] sm:$0xff]
    %228 = vset.pattern.permute.xlu0 0
    %229 = vperm.xlu0 %228, %v226
    %v230 = vpop.permute.xlu0 %229
    %233 = vrot.lane.b32.xlu0 %v217, 97
    %v234 = vpop.permute.xlu0 %233
    %235 = vrot.lane.b32.xlu0 %v221, 97
    %v236 = vpop.permute.xlu0 %235
    %237 = vrot.lane.b32.xlu0 %v224, 97
    %v238 = vpop.permute.xlu0 %237
    %vm242 = vcmask 195584
    %v244 = vsel %vm242, %v225, 0
    %246 = vmatprep.subr.mxu0 0.0
    %247 = vmatpush1.msra.mxu0 0.0
    %248 = vmatprep.subr.mxu0 0.0
    %249 = vmatpush1.msra.mxu0 0.0
    %250 = vmatprep.subr.mxu0 0.0
    %251 = vmatpush1.msra.mxu0 0.0
    %252 = vmatprep.subr.mxu0 0.0
    %253 = vmatpush1.msra.mxu0 0.0
    %254 = vmatprep.subr.mxu0 0.0
    %255 = vmatpush1.msra.mxu0 0.0
    %256 = vmatprep.subr.mxu0 0.0
    %257 = vmatpush1.msra.mxu0 0.0
    %258 = vmatprep.subr.mxu0 0.0
    %259 = vmatpush1.msra.mxu0 0.0
    %260 = vmatprep.subr.mxu0 0.0
    %261 = vmatpush1.msra.mxu0 0.0
    %262 = vmatprep.subr.mxu0 0.0
    %263 = vmatpush1.msra.mxu0 0.0
    %264 = vmatprep.subr.mxu0 0.0
    %265 = vmatpush1.msra.mxu0 0.0
    %266 = vmatprep.subr.mxu0 0.0
    %267 = vmatpush1.msra.mxu0 0.0
    %268 = vmatprep.subr.mxu0 0.0
    %269 = vmatpush1.msra.mxu0 0.0
    %270 = vmatprep.subr.mxu0 0.0
    %271 = vmatpush1.msra.mxu0 0.0
    %272 = vmatprep.subr.mxu0 0.0
    %273 = vmatpush1.msra.mxu0 %v238
    %274 = vmatprep.subr.mxu0 0.0
    %275 = vmatpush1.msra.mxu0 %v236
    %276 = vmatprep.subr.mxu0 0.0
    %277 = vmatpush1.msra.mxu0 %v234
    %278 = vmatprep.subr.mxu0 0.0
    %279 = vmatpush2.msra.mxu0 0.0
    %280 = vmatprep.subr.mxu0 0.0
    %281 = vmatpush2.msra.mxu0 0.0
    %282 = vmatprep.subr.mxu0 0.0
    %283 = vmatpush2.msra.mxu0 0.0
    %284 = vmatprep.subr.mxu0 0.0
    %285 = vmatpush2.msra.mxu0 0.0
    %286 = vmatprep.subr.mxu0 0.0
    %287 = vmatpush2.msra.mxu0 0.0
    %288 = vmatprep.subr.mxu0 0.0
    %289 = vmatpush2.msra.mxu0 0.0
    %290 = vmatprep.subr.mxu0 0.0
    %291 = vmatpush2.msra.mxu0 0.0
    %292 = vmatprep.subr.mxu0 0.0
    %293 = vmatpush2.msra.mxu0 0.0
    %294 = vmatprep.subr.mxu0 0.0
    %295 = vmatpush2.msra.mxu0 0.0
    %296 = vmatprep.subr.mxu0 0.0
    %297 = vmatpush2.msra.mxu0 0.0
    %298 = vmatprep.subr.mxu0 0.0
    %299 = vmatpush2.msra.mxu0 0.0
    %300 = vmatprep.subr.mxu0 0.0
    %301 = vmatpush2.msra.mxu0 0.0
    %302 = vmatprep.subr.mxu0 0.0
    %303 = vmatpush2.msra.mxu0 0.0
    %304 = vmatprep.subr.mxu0 0.0
    %305 = vmatpush2.msra.mxu0 0.0
    %306 = vmatprep.subr.mxu0 0.0
    %307 = vmatpush2.msra.mxu0 0.0
    %308 = vmatprep.subr.mxu0 0.0
    %309 = vmatpush2.msra.mxu0 0.0
    %310 = vmatprep.mubr.f32.mxu0 0.0
    %311 = vmatmul.mubr.f32.gmra.mxu0 %v244
    %v312 = vpop.f32.mrf.mxu0
    %v313 = vadd.f32 %v230, %v312
    %v314 = vpop.f32.mrf.mxu0
    %315 = vdwg.mxu0
    %v316 = vadd.f32 %v205, %v313
    %vm317 = vcmask 261120
    %318 = vst.msk [vmem:[#allocation3] sm:$0xff] %vm317, %v316
    %319 = vrot.lane.b32.xlu0 %v316, 32
    %v320 = vpop.permute.xlu0 %319
    %v321 = vsel %vm84, %v320, %v316
    %322 = vrot.lane.b32.xlu0 %v321, 32
    %v323 = vpop.permute.xlu0 %322
    %v324 = vsel %vm84, %v323, %v316
    %v325 = vmul.f32 %v324, %v97
    %v326 = vmul.f32 %v324, %v106
    %328 = vrot.lane.b32.xlu0 %v316, 31
    %v329 = vpop.permute.xlu0 %328
    %331 = vrot.lane.b32.xlu0 %v326, 30
    %v332 = vpop.permute.xlu0 %331
    %v333 = vld [vmem:[%s7] sm:$0xff]
    %v334 = vld [vmem:[%s7 + $0x8] sm:$0xff]
    %v335 = vld [vmem:[%s8] sm:$0xff]
    %v336 = vld [vmem:[%s8 + $0x8] sm:$0xff]
    %338 = vset.pattern.permute.xlu0 0
    %339 = vperm.xlu0 %338, %v335
    %v340 = vpop.permute.xlu0 %339
    %343 = vset.pattern.permute.xlu0 0
    %344 = vperm.xlu0 %343, %v336
    %v345 = vpop.permute.xlu0 %344
    %348 = vrot.lane.b32.xlu0 %v325, 97
    %v349 = vpop.permute.xlu0 %348
    %350 = vrot.lane.b32.xlu0 %v329, 97
    %v351 = vpop.permute.xlu0 %350
    %352 = vrot.lane.b32.xlu0 %v332, 97
    %v353 = vpop.permute.xlu0 %352
    %v358 = vsel %vm242, %v333, 0
    %v361 = vsel %vm242, %v334, 0
    %363 = vmatprep.subr.mxu0 0.0
    %364 = vmatpush1.msra.mxu0 0.0
    %365 = vmatprep.subr.mxu0 0.0
    %366 = vmatpush1.msra.mxu0 0.0
    %367 = vmatprep.subr.mxu0 0.0
    %368 = vmatpush1.msra.mxu0 0.0
    %369 = vmatprep.subr.mxu0 0.0
    %370 = vmatpush1.msra.mxu0 0.0
    %371 = vmatprep.subr.mxu0 0.0
    %372 = vmatpush1.msra.mxu0 0.0
    %373 = vmatprep.subr.mxu0 0.0
    %374 = vmatpush1.msra.mxu0 0.0
    %375 = vmatprep.subr.mxu0 0.0
    %376 = vmatpush1.msra.mxu0 0.0
    %377 = vmatprep.subr.mxu0 0.0
    %378 = vmatpush1.msra.mxu0 0.0
    %379 = vmatprep.subr.mxu0 0.0
    %380 = vmatpush1.msra.mxu0 0.0
    %381 = vmatprep.subr.mxu0 0.0
    %382 = vmatpush1.msra.mxu0 0.0
    %383 = vmatprep.subr.mxu0 0.0
    %384 = vmatpush1.msra.mxu0 0.0
    %385 = vmatprep.subr.mxu0 0.0
    %386 = vmatpush1.msra.mxu0 0.0
    %387 = vmatprep.subr.mxu0 0.0
    %388 = vmatpush1.msra.mxu0 0.0
    %389 = vmatprep.subr.mxu0 0.0
    %390 = vmatpush1.msra.mxu0 %v353
    %391 = vmatprep.subr.mxu0 0.0
    %392 = vmatpush1.msra.mxu0 %v351
    %393 = vmatprep.subr.mxu0 0.0
    %394 = vmatpush1.msra.mxu0 %v349
    %395 = vmatprep.subr.mxu0 0.0
    %396 = vmatpush2.msra.mxu0 0.0
    %397 = vmatprep.subr.mxu0 0.0
    %398 = vmatpush2.msra.mxu0 0.0
    %399 = vmatprep.subr.mxu0 0.0
    %400 = vmatpush2.msra.mxu0 0.0
    %401 = vmatprep.subr.mxu0 0.0
    %402 = vmatpush2.msra.mxu0 0.0
    %403 = vmatprep.subr.mxu0 0.0
    %404 = vmatpush2.msra.mxu0 0.0
    %405 = vmatprep.subr.mxu0 0.0
    %406 = vmatpush2.msra.mxu0 0.0
    %407 = vmatprep.subr.mxu0 0.0
    %408 = vmatpush2.msra.mxu0 0.0
    %409 = vmatprep.subr.mxu0 0.0
    %410 = vmatpush2.msra.mxu0 0.0
    %411 = vmatprep.subr.mxu0 0.0
    %412 = vmatpush2.msra.mxu0 0.0
    %413 = vmatprep.subr.mxu0 0.0
    %414 = vmatpush2.msra.mxu0 0.0
    %415 = vmatprep.subr.mxu0 0.0
    %416 = vmatpush2.msra.mxu0 0.0
    %417 = vmatprep.subr.mxu0 0.0
    %418 = vmatpush2.msra.mxu0 0.0
    %419 = vmatprep.subr.mxu0 0.0
    %420 = vmatpush2.msra.mxu0 0.0
    %421 = vmatprep.subr.mxu0 0.0
    %422 = vmatpush2.msra.mxu0 0.0
    %423 = vmatprep.subr.mxu0 0.0
    %424 = vmatpush2.msra.mxu0 0.0
    %425 = vmatprep.subr.mxu0 0.0
    %426 = vmatpush2.msra.mxu0 0.0
    %427 = vmatprep.mubr.f32.mxu0 0.0
    %428 = vmatmul.mubr.f32.gmra.mxu0 %v358
    %v429 = vpop.f32.mrf.mxu0
    %v430 = vadd.f32 %v340, %v429
    %v431 = vpop.f32.mrf.mxu0
    %432 = vmatprep.mubr.f32.mxu0 0.0
    %433 = vmatmul.mubr.f32.gmra.mxu0 %v361
    %v434 = vpop.f32.mrf.mxu0
    %v435 = vadd.f32 %v345, %v434
    %v436 = vpop.f32.mrf.mxu0
    %437 = vdwg.mxu0
    %vm438 = vcmp.gt.f32.partialorder %v430, 0.0
    %vm439 = vcmp.gt.f32.partialorder %v435, 0.0
    %v440 = vmul.f32 %v430, 0.2
    %v441 = vmul.f32 %v435, 0.2
    %v442 = vsel %vm438, %v430, %v440
    %v443 = vsel %vm439, %v435, %v441
    %444 = vrot.lane.b32.xlu0 %v442, 32
    %v445 = vpop.permute.xlu0 %444
    %v446 = vsel %vm84, %v445, %v442
    %447 = vrot.lane.b32.xlu0 %v443, 32
    %v448 = vpop.permute.xlu0 %447
    %v449 = vsel %vm84, %v448, %v443
    %450 = vrot.lane.b32.xlu0 %v446, 32
    %v451 = vpop.permute.xlu0 %450
    %452 = vrot.lane.b32.xlu0 %v449, 32
    %v453 = vpop.permute.xlu0 %452
    %v454 = vsel %vm84, %v451, %v442
    %v455 = vsel %vm84, %v453, %v443
    %v456 = vmul.f32 %v454, %v97
    %v457 = vmul.f32 %v455, %v97
    %v458 = vmul.f32 %v454, %v106
    %v459 = vmul.f32 %v455, %v106
    %462 = vrot.lane.b32.xlu0 %v442, 31
    %v463 = vpop.permute.xlu0 %462
    %464 = vrot.lane.b32.xlu0 %v443, 31
    %v465 = vpop.permute.xlu0 %464
    %468 = vrot.lane.b32.xlu0 %v458, 30
    %v469 = vpop.permute.xlu0 %468
    %470 = vrot.lane.b32.xlu0 %v459, 30
    %v471 = vpop.permute.xlu0 %470
    %v472 = vld [vmem:[%s9] sm:$0xff]
    %v473 = vld [vmem:[%s9 + $0x8] sm:$0xff]
    %v474 = vld [vmem:[%s10] sm:$0xff]
    %v475 = vld [vmem:[%s10 + $0x8] sm:$0xff]
    %477 = vset.pattern.permute.xlu0 0
    %478 = vperm.xlu0 %477, %v474
    %v479 = vpop.permute.xlu0 %478
    %482 = vset.pattern.permute.xlu0 0
    %483 = vperm.xlu0 %482, %v475
    %v484 = vpop.permute.xlu0 %483
    %488 = vrot.lane.b32.xlu0 %v456, 97
    %v489 = vpop.permute.xlu0 %488
    %490 = vrot.lane.b32.xlu0 %v457, 97
    %v491 = vpop.permute.xlu0 %490
    %492 = vrot.lane.b32.xlu0 %v463, 97
    %v493 = vpop.permute.xlu0 %492
    %494 = vrot.lane.b32.xlu0 %v465, 97
    %v495 = vpop.permute.xlu0 %494
    %496 = vrot.lane.b32.xlu0 %v469, 97
    %v497 = vpop.permute.xlu0 %496
    %498 = vrot.lane.b32.xlu0 %v471, 97
    %v499 = vpop.permute.xlu0 %498
    %vm506 = vcmask 392192
    %v508 = vsel %vm506, %v472, 0
    %v511 = vsel %vm506, %v473, 0
    %513 = vmatprep.subr.mxu0 0.0
    %514 = vmatpush1.msra.mxu0 0.0
    %515 = vmatprep.subr.mxu0 0.0
    %516 = vmatpush1.msra.mxu0 0.0
    %517 = vmatprep.subr.mxu0 0.0
    %518 = vmatpush1.msra.mxu0 0.0
    %519 = vmatprep.subr.mxu0 0.0
    %520 = vmatpush1.msra.mxu0 0.0
    %521 = vmatprep.subr.mxu0 0.0
    %522 = vmatpush1.msra.mxu0 0.0
    %523 = vmatprep.subr.mxu0 0.0
    %524 = vmatpush1.msra.mxu0 0.0
    %525 = vmatprep.subr.mxu0 0.0
    %526 = vmatpush1.msra.mxu0 0.0
    %527 = vmatprep.subr.mxu0 0.0
    %528 = vmatpush1.msra.mxu0 0.0
    %529 = vmatprep.subr.mxu0 0.0
    %530 = vmatpush1.msra.mxu0 0.0
    %531 = vmatprep.subr.mxu0 0.0
    %532 = vmatpush1.msra.mxu0 0.0
    %533 = vmatprep.subr.mxu0 0.0
    %534 = vmatpush1.msra.mxu0 %v499
    %535 = vmatprep.subr.mxu0 0.0
    %536 = vmatpush1.msra.mxu0 %v497
    %537 = vmatprep.subr.mxu0 0.0
    %538 = vmatpush1.msra.mxu0 %v495
    %539 = vmatprep.subr.mxu0 0.0
    %540 = vmatpush1.msra.mxu0 %v493
    %541 = vmatprep.subr.mxu0 0.0
    %542 = vmatpush1.msra.mxu0 %v491
    %543 = vmatprep.subr.mxu0 0.0
    %544 = vmatpush1.msra.mxu0 %v489
    %545 = vmatprep.subr.mxu0 0.0
    %546 = vmatpush2.msra.mxu0 0.0
    %547 = vmatprep.subr.mxu0 0.0
    %548 = vmatpush2.msra.mxu0 0.0
    %549 = vmatprep.subr.mxu0 0.0
    %550 = vmatpush2.msra.mxu0 0.0
    %551 = vmatprep.subr.mxu0 0.0
    %552 = vmatpush2.msra.mxu0 0.0
    %553 = vmatprep.subr.mxu0 0.0
    %554 = vmatpush2.msra.mxu0 0.0
    %555 = vmatprep.subr.mxu0 0.0
    %556 = vmatpush2.msra.mxu0 0.0
    %557 = vmatprep.subr.mxu0 0.0
    %558 = vmatpush2.msra.mxu0 0.0
    %559 = vmatprep.subr.mxu0 0.0
    %560 = vmatpush2.msra.mxu0 0.0
    %561 = vmatprep.subr.mxu0 0.0
    %562 = vmatpush2.msra.mxu0 0.0
    %563 = vmatprep.subr.mxu0 0.0
    %564 = vmatpush2.msra.mxu0 0.0
    %565 = vmatprep.subr.mxu0 0.0
    %566 = vmatpush2.msra.mxu0 0.0
    %567 = vmatprep.subr.mxu0 0.0
    %568 = vmatpush2.msra.mxu0 0.0
    %569 = vmatprep.subr.mxu0 0.0
    %570 = vmatpush2.msra.mxu0 0.0
    %571 = vmatprep.subr.mxu0 0.0
    %572 = vmatpush2.msra.mxu0 0.0
    %573 = vmatprep.subr.mxu0 0.0
    %574 = vmatpush2.msra.mxu0 0.0
    %575 = vmatprep.subr.mxu0 0.0
    %576 = vmatpush2.msra.mxu0 0.0
    %577 = vmatprep.mubr.f32.mxu0 0.0
    %578 = vmatmul.mubr.f32.gmra.mxu0 %v508
    %v579 = vpop.f32.mrf.mxu0
    %v580 = vadd.f32 %v479, %v579
    %v581 = vpop.f32.mrf.mxu0
    %582 = vmatprep.mubr.f32.mxu0 0.0
    %583 = vmatmul.mubr.f32.gmra.mxu0 %v511
    %v584 = vpop.f32.mrf.mxu0
    %v585 = vadd.f32 %v484, %v584
    %v586 = vpop.f32.mrf.mxu0
    %587 = vdwg.mxu0
    %v588 = vadd.f32 %v430, %v580
    %v589 = vadd.f32 %v435, %v585
    %590 = vst.msk [vmem:[#allocation5] sm:$0xff] %vm317, %v588
    %591 = vst.msk [vmem:[#allocation5 + $0x8] sm:$0xff] %vm317, %v589
    %592 = vrot.lane.b32.xlu0 %v588, 32
    %v593 = vpop.permute.xlu0 %592
    %v594 = vsel %vm84, %v593, %v588
    %595 = vrot.lane.b32.xlu0 %v589, 32
    %v596 = vpop.permute.xlu0 %595
    %v597 = vsel %vm84, %v596, %v589
    %598 = vrot.lane.b32.xlu0 %v594, 32
    %v599 = vpop.permute.xlu0 %598
    %600 = vrot.lane.b32.xlu0 %v597, 32
    %v601 = vpop.permute.xlu0 %600
    %v602 = vsel %vm84, %v599, %v588
    %v603 = vsel %vm84, %v601, %v589
    %v604 = vmul.f32 %v602, %v97
    %v605 = vmul.f32 %v603, %v97
    %v606 = vmul.f32 %v602, %v106
    %v607 = vmul.f32 %v603, %v106
    %610 = vrot.lane.b32.xlu0 %v588, 31
    %v611 = vpop.permute.xlu0 %610
    %612 = vrot.lane.b32.xlu0 %v589, 31
    %v613 = vpop.permute.xlu0 %612
    %616 = vrot.lane.b32.xlu0 %v606, 30
    %v617 = vpop.permute.xlu0 %616
    %618 = vrot.lane.b32.xlu0 %v607, 30
    %v619 = vpop.permute.xlu0 %618
    %v620 = vld [vmem:[%s11] sm:$0xff]
    %v621 = vld [vmem:[%s11 + $0x8] sm:$0xff]
    %v622 = vld [vmem:[%s11 + $0x10] sm:$0xff]
    %v623 = vld [vmem:[%s11 + $0x18] sm:$0xff]
    %v624 = vld [vmem:[%s12] sm:$0xff]
    %v625 = vld [vmem:[%s12 + $0x8] sm:$0xff]
    %v626 = vld [vmem:[%s12 + $0x10] sm:$0xff]
    %v627 = vld [vmem:[%s12 + $0x18] sm:$0xff]
    %629 = vset.pattern.permute.xlu0 0
    %630 = vperm.xlu0 %629, %v624
    %v631 = vpop.permute.xlu0 %630
    %634 = vset.pattern.permute.xlu0 0
    %635 = vperm.xlu0 %634, %v625
    %v636 = vpop.permute.xlu0 %635
    %639 = vset.pattern.permute.xlu0 0
    %640 = vperm.xlu0 %639, %v626
    %v641 = vpop.permute.xlu0 %640
    %644 = vset.pattern.permute.xlu0 0
    %645 = vperm.xlu0 %644, %v627
    %v646 = vpop.permute.xlu0 %645
    %650 = vrot.lane.b32.xlu0 %v604, 97
    %v651 = vpop.permute.xlu0 %650
    %652 = vrot.lane.b32.xlu0 %v605, 97
    %v653 = vpop.permute.xlu0 %652
    %654 = vrot.lane.b32.xlu0 %v611, 97
    %v655 = vpop.permute.xlu0 %654
    %656 = vrot.lane.b32.xlu0 %v613, 97
    %v657 = vpop.permute.xlu0 %656
    %658 = vrot.lane.b32.xlu0 %v617, 97
    %v659 = vpop.permute.xlu0 %658
    %660 = vrot.lane.b32.xlu0 %v619, 97
    %v661 = vpop.permute.xlu0 %660
    %v669 = vsel %vm506, %v620, 0
    %v672 = vsel %vm506, %v621, 0
    %v675 = vsel %vm506, %v622, 0
    %v678 = vsel %vm506, %v623, 0
    %680 = vmatprep.subr.mxu0 0.0
    %681 = vmatpush1.msra.mxu0 0.0
    %682 = vmatprep.subr.mxu0 0.0
    %683 = vmatpush1.msra.mxu0 0.0
    %684 = vmatprep.subr.mxu0 0.0
    %685 = vmatpush1.msra.mxu0 0.0
    %686 = vmatprep.subr.mxu0 0.0
    %687 = vmatpush1.msra.mxu0 0.0
    %688 = vmatprep.subr.mxu0 0.0
    %689 = vmatpush1.msra.mxu0 0.0
    %690 = vmatprep.subr.mxu0 0.0
    %691 = vmatpush1.msra.mxu0 0.0
    %692 = vmatprep.subr.mxu0 0.0
    %693 = vmatpush1.msra.mxu0 0.0
    %694 = vmatprep.subr.mxu0 0.0
    %695 = vmatpush1.msra.mxu0 0.0
    %696 = vmatprep.subr.mxu0 0.0
    %697 = vmatpush1.msra.mxu0 0.0
    %698 = vmatprep.subr.mxu0 0.0
    %699 = vmatpush1.msra.mxu0 0.0
    %700 = vmatprep.subr.mxu0 0.0
    %701 = vmatpush1.msra.mxu0 %v661
    %702 = vmatprep.subr.mxu0 0.0
    %703 = vmatpush1.msra.mxu0 %v659
    %704 = vmatprep.subr.mxu0 0.0
    %705 = vmatpush1.msra.mxu0 %v657
    %706 = vmatprep.subr.mxu0 0.0
    %707 = vmatpush1.msra.mxu0 %v655
    %708 = vmatprep.subr.mxu0 0.0
    %709 = vmatpush1.msra.mxu0 %v653
    %710 = vmatprep.subr.mxu0 0.0
    %711 = vmatpush1.msra.mxu0 %v651
    %712 = vmatprep.subr.mxu0 0.0
    %713 = vmatpush2.msra.mxu0 0.0
    %714 = vmatprep.subr.mxu0 0.0
    %715 = vmatpush2.msra.mxu0 0.0
    %716 = vmatprep.subr.mxu0 0.0
    %717 = vmatpush2.msra.mxu0 0.0
    %718 = vmatprep.subr.mxu0 0.0
    %719 = vmatpush2.msra.mxu0 0.0
    %720 = vmatprep.subr.mxu0 0.0
    %721 = vmatpush2.msra.mxu0 0.0
    %722 = vmatprep.subr.mxu0 0.0
    %723 = vmatpush2.msra.mxu0 0.0
    %724 = vmatprep.subr.mxu0 0.0
    %725 = vmatpush2.msra.mxu0 0.0
    %726 = vmatprep.subr.mxu0 0.0
    %727 = vmatpush2.msra.mxu0 0.0
    %728 = vmatprep.subr.mxu0 0.0
    %729 = vmatpush2.msra.mxu0 0.0
    %730 = vmatprep.subr.mxu0 0.0
    %731 = vmatpush2.msra.mxu0 0.0
    %732 = vmatprep.subr.mxu0 0.0
    %733 = vmatpush2.msra.mxu0 0.0
    %734 = vmatprep.subr.mxu0 0.0
    %735 = vmatpush2.msra.mxu0 0.0
    %736 = vmatprep.subr.mxu0 0.0
    %737 = vmatpush2.msra.mxu0 0.0
    %738 = vmatprep.subr.mxu0 0.0
    %739 = vmatpush2.msra.mxu0 0.0
    %740 = vmatprep.subr.mxu0 0.0
    %741 = vmatpush2.msra.mxu0 0.0
    %742 = vmatprep.subr.mxu0 0.0
    %743 = vmatpush2.msra.mxu0 0.0
    %744 = vmatprep.mubr.f32.mxu0 0.0
    %745 = vmatmul.mubr.f32.gmra.mxu0 %v669
    %v746 = vpop.f32.mrf.mxu0
    %v747 = vadd.f32 %v631, %v746
    %v748 = vpop.f32.mrf.mxu0
    %749 = vmatprep.mubr.f32.mxu0 0.0
    %750 = vmatmul.mubr.f32.gmra.mxu0 %v672
    %v751 = vpop.f32.mrf.mxu0
    %v752 = vadd.f32 %v636, %v751
    %v753 = vpop.f32.mrf.mxu0
    %754 = vmatprep.mubr.f32.mxu0 0.0
    %755 = vmatmul.mubr.f32.gmra.mxu0 %v675
    %v756 = vpop.f32.mrf.mxu0
    %v757 = vadd.f32 %v641, %v756
    %v758 = vpop.f32.mrf.mxu0
    %759 = vmatprep.mubr.f32.mxu0 0.0
    %760 = vmatmul.mubr.f32.gmra.mxu0 %v678
    %v761 = vpop.f32.mrf.mxu0
    %v762 = vadd.f32 %v646, %v761
    %v763 = vpop.f32.mrf.mxu0
    %764 = vdwg.mxu0
    %vm765 = vcmp.gt.f32.partialorder %v747, 0.0
    %vm766 = vcmp.gt.f32.partialorder %v752, 0.0
    %vm767 = vcmp.gt.f32.partialorder %v757, 0.0
    %vm768 = vcmp.gt.f32.partialorder %v762, 0.0
    %v769 = vmul.f32 %v747, 0.2
    %v770 = vmul.f32 %v752, 0.2
    %v771 = vmul.f32 %v757, 0.2
    %v772 = vmul.f32 %v762, 0.2
    %v773 = vsel %vm765, %v747, %v769
    %v774 = vsel %vm766, %v752, %v770
    %v775 = vsel %vm767, %v757, %v771
    %v776 = vsel %vm768, %v762, %v772
    %777 = vrot.lane.b32.xlu0 %v773, 32
    %v778 = vpop.permute.xlu0 %777
    %v779 = vsel %vm84, %v778, %v773
    %780 = vrot.lane.b32.xlu0 %v774, 32
    %v781 = vpop.permute.xlu0 %780
    %v782 = vsel %vm84, %v781, %v774
    %783 = vrot.lane.b32.xlu0 %v775, 32
    %v784 = vpop.permute.xlu0 %783
    %v785 = vsel %vm84, %v784, %v775
    %786 = vrot.lane.b32.xlu0 %v776, 32
    %v787 = vpop.permute.xlu0 %786
    %v788 = vsel %vm84, %v787, %v776
    %789 = vrot.lane.b32.xlu0 %v779, 32
    %v790 = vpop.permute.xlu0 %789
    %791 = vrot.lane.b32.xlu0 %v782, 32
    %v792 = vpop.permute.xlu0 %791
    %793 = vrot.lane.b32.xlu0 %v785, 32
    %v794 = vpop.permute.xlu0 %793
    %795 = vrot.lane.b32.xlu0 %v788, 32
    %v796 = vpop.permute.xlu0 %795
    %v797 = vsel %vm84, %v790, %v773
    %v798 = vsel %vm84, %v792, %v774
    %v799 = vsel %vm84, %v794, %v775
    %v800 = vsel %vm84, %v796, %v776
    %v801 = vmul.f32 %v797, %v97
    %v802 = vmul.f32 %v798, %v97
    %v803 = vmul.f32 %v799, %v97
    %v804 = vmul.f32 %v800, %v97
    %v805 = vmul.f32 %v797, %v106
    %v806 = vmul.f32 %v798, %v106
    %v807 = vmul.f32 %v799, %v106
    %v808 = vmul.f32 %v800, %v106
    %813 = vrot.lane.b32.xlu0 %v773, 31
    %v814 = vpop.permute.xlu0 %813
    %815 = vrot.lane.b32.xlu0 %v774, 31
    %v816 = vpop.permute.xlu0 %815
    %817 = vrot.lane.b32.xlu0 %v775, 31
    %v818 = vpop.permute.xlu0 %817
    %819 = vrot.lane.b32.xlu0 %v776, 31
    %v820 = vpop.permute.xlu0 %819
    %825 = vrot.lane.b32.xlu0 %v805, 30
    %v826 = vpop.permute.xlu0 %825
    %827 = vrot.lane.b32.xlu0 %v806, 30
    %v828 = vpop.permute.xlu0 %827
    %829 = vrot.lane.b32.xlu0 %v807, 30
    %v830 = vpop.permute.xlu0 %829
    %831 = vrot.lane.b32.xlu0 %v808, 30
    %v832 = vpop.permute.xlu0 %831
    %v833 = vld [vmem:[%s13] sm:$0xff]
    %v834 = vld [vmem:[%s13 + $0x8] sm:$0xff]
    %v835 = vld [vmem:[%s13 + $0x10] sm:$0xff]
    %v836 = vld [vmem:[%s13 + $0x18] sm:$0xff]
    %v837 = vld [vmem:[%s14] sm:$0xff]
    %v838 = vld [vmem:[%s14 + $0x8] sm:$0xff]
    %v839 = vld [vmem:[%s14 + $0x10] sm:$0xff]
    %v840 = vld [vmem:[%s14 + $0x18] sm:$0xff]
    %842 = vset.pattern.permute.xlu0 0
    %843 = vperm.xlu0 %842, %v837
    %v844 = vpop.permute.xlu0 %843
    %847 = vset.pattern.permute.xlu0 0
    %848 = vperm.xlu0 %847, %v838
    %v849 = vpop.permute.xlu0 %848
    %852 = vset.pattern.permute.xlu0 0
    %853 = vperm.xlu0 %852, %v839
    %v854 = vpop.permute.xlu0 %853
    %857 = vset.pattern.permute.xlu0 0
    %858 = vperm.xlu0 %857, %v840
    %v859 = vpop.permute.xlu0 %858
    %865 = vrot.lane.b32.xlu0 %v801, 97
    %v866 = vpop.permute.xlu0 %865
    %867 = vrot.lane.b32.xlu0 %v802, 97
    %v868 = vpop.permute.xlu0 %867
    %869 = vrot.lane.b32.xlu0 %v803, 97
    %v870 = vpop.permute.xlu0 %869
    %871 = vrot.lane.b32.xlu0 %v804, 97
    %v872 = vpop.permute.xlu0 %871
    %873 = vrot.lane.b32.xlu0 %v814, 97
    %v874 = vpop.permute.xlu0 %873
    %875 = vrot.lane.b32.xlu0 %v816, 97
    %v876 = vpop.permute.xlu0 %875
    %877 = vrot.lane.b32.xlu0 %v818, 97
    %v878 = vpop.permute.xlu0 %877
    %879 = vrot.lane.b32.xlu0 %v820, 97
    %v880 = vpop.permute.xlu0 %879
    %881 = vrot.lane.b32.xlu0 %v826, 97
    %v882 = vpop.permute.xlu0 %881
    %883 = vrot.lane.b32.xlu0 %v828, 97
    %v884 = vpop.permute.xlu0 %883
    %885 = vrot.lane.b32.xlu0 %v830, 97
    %v886 = vpop.permute.xlu0 %885
    %887 = vrot.lane.b32.xlu0 %v832, 97
    %v888 = vpop.permute.xlu0 %887
    %vm901 = vcmask 785408
    %v903 = vsel %vm901, %v833, 0
    %v906 = vsel %vm901, %v834, 0
    %v909 = vsel %vm901, %v835, 0
    %v912 = vsel %vm901, %v836, 0
    %914 = vmatprep.subr.mxu0 0.0
    %915 = vmatpush1.msra.mxu0 0.0
    %916 = vmatprep.subr.mxu0 0.0
    %917 = vmatpush1.msra.mxu0 0.0
    %918 = vmatprep.subr.mxu0 0.0
    %919 = vmatpush1.msra.mxu0 0.0
    %920 = vmatprep.subr.mxu0 0.0
    %921 = vmatpush1.msra.mxu0 0.0
    %922 = vmatprep.subr.mxu0 0.0
    %923 = vmatpush1.msra.mxu0 %v888
    %924 = vmatprep.subr.mxu0 0.0
    %925 = vmatpush1.msra.mxu0 %v886
    %926 = vmatprep.subr.mxu0 0.0
    %927 = vmatpush1.msra.mxu0 %v884
    %928 = vmatprep.subr.mxu0 0.0
    %929 = vmatpush1.msra.mxu0 %v882
    %930 = vmatprep.subr.mxu0 0.0
    %931 = vmatpush1.msra.mxu0 %v880
    %932 = vmatprep.subr.mxu0 0.0
    %933 = vmatpush1.msra.mxu0 %v878
    %934 = vmatprep.subr.mxu0 0.0
    %935 = vmatpush1.msra.mxu0 %v876
    %936 = vmatprep.subr.mxu0 0.0
    %937 = vmatpush1.msra.mxu0 %v874
    %938 = vmatprep.subr.mxu0 0.0
    %939 = vmatpush1.msra.mxu0 %v872
    %940 = vmatprep.subr.mxu0 0.0
    %941 = vmatpush1.msra.mxu0 %v870
    %942 = vmatprep.subr.mxu0 0.0
    %943 = vmatpush1.msra.mxu0 %v868
    %944 = vmatprep.subr.mxu0 0.0
    %945 = vmatpush1.msra.mxu0 %v866
    %946 = vmatprep.subr.mxu0 0.0
    %947 = vmatpush2.msra.mxu0 0.0
    %948 = vmatprep.subr.mxu0 0.0
    %949 = vmatpush2.msra.mxu0 0.0
    %950 = vmatprep.subr.mxu0 0.0
    %951 = vmatpush2.msra.mxu0 0.0
    %952 = vmatprep.subr.mxu0 0.0
    %953 = vmatpush2.msra.mxu0 0.0
    %954 = vmatprep.subr.mxu0 0.0
    %955 = vmatpush2.msra.mxu0 0.0
    %956 = vmatprep.subr.mxu0 0.0
    %957 = vmatpush2.msra.mxu0 0.0
    %958 = vmatprep.subr.mxu0 0.0
    %959 = vmatpush2.msra.mxu0 0.0
    %960 = vmatprep.subr.mxu0 0.0
    %961 = vmatpush2.msra.mxu0 0.0
    %962 = vmatprep.subr.mxu0 0.0
    %963 = vmatpush2.msra.mxu0 0.0
    %964 = vmatprep.subr.mxu0 0.0
    %965 = vmatpush2.msra.mxu0 0.0
    %966 = vmatprep.subr.mxu0 0.0
    %967 = vmatpush2.msra.mxu0 0.0
    %968 = vmatprep.subr.mxu0 0.0
    %969 = vmatpush2.msra.mxu0 0.0
    %970 = vmatprep.subr.mxu0 0.0
    %971 = vmatpush2.msra.mxu0 0.0
    %972 = vmatprep.subr.mxu0 0.0
    %973 = vmatpush2.msra.mxu0 0.0
    %974 = vmatprep.subr.mxu0 0.0
    %975 = vmatpush2.msra.mxu0 0.0
    %976 = vmatprep.subr.mxu0 0.0
    %977 = vmatpush2.msra.mxu0 0.0
    %978 = vmatprep.mubr.f32.mxu0 0.0
    %979 = vmatmul.mubr.f32.gmra.mxu0 %v903
    %v980 = vpop.f32.mrf.mxu0
    %v981 = vadd.f32 %v844, %v980
    %v982 = vpop.f32.mrf.mxu0
    %983 = vmatprep.mubr.f32.mxu0 0.0
    %984 = vmatmul.mubr.f32.gmra.mxu0 %v906
    %v985 = vpop.f32.mrf.mxu0
    %v986 = vadd.f32 %v849, %v985
    %v987 = vpop.f32.mrf.mxu0
    %988 = vmatprep.mubr.f32.mxu0 0.0
    %989 = vmatmul.mubr.f32.gmra.mxu0 %v909
    %v990 = vpop.f32.mrf.mxu0
    %v991 = vadd.f32 %v854, %v990
    %v992 = vpop.f32.mrf.mxu0
    %993 = vmatprep.mubr.f32.mxu0 0.0
    %994 = vmatmul.mubr.f32.gmra.mxu0 %v912
    %v995 = vpop.f32.mrf.mxu0
    %v996 = vadd.f32 %v859, %v995
    %v997 = vpop.f32.mrf.mxu0
    %998 = vdwg.mxu0
    %v999 = vadd.f32 %v747, %v981
    %v1000 = vadd.f32 %v752, %v986
    %v1001 = vadd.f32 %v757, %v991
    %v1002 = vadd.f32 %v762, %v996
    %1003 = vst.msk [vmem:[#allocation7] sm:$0xff] %vm317, %v999
    %1004 = vst.msk [vmem:[#allocation7 + $0x8] sm:$0xff] %vm317, %v1000
    %1005 = vst.msk [vmem:[#allocation7 + $0x10] sm:$0xff] %vm317, %v1001
    %1006 = vst.msk [vmem:[#allocation7 + $0x18] sm:$0xff] %vm317, %v1002
    %1007 = vrot.lane.b32.xlu0 %v999, 32
    %v1008 = vpop.permute.xlu0 %1007
    %v1009 = vsel %vm84, %v1008, %v999
    %1010 = vrot.lane.b32.xlu0 %v1000, 32
    %v1011 = vpop.permute.xlu0 %1010
    %v1012 = vsel %vm84, %v1011, %v1000
    %1013 = vrot.lane.b32.xlu0 %v1001, 32
    %v1014 = vpop.permute.xlu0 %1013
    %v1015 = vsel %vm84, %v1014, %v1001
    %1016 = vrot.lane.b32.xlu0 %v1002, 32
    %v1017 = vpop.permute.xlu0 %1016
    %v1018 = vsel %vm84, %v1017, %v1002
    %1019 = vrot.lane.b32.xlu0 %v1009, 32
    %v1020 = vpop.permute.xlu0 %1019
    %1021 = vrot.lane.b32.xlu0 %v1012, 32
    %v1022 = vpop.permute.xlu0 %1021
    %1023 = vrot.lane.b32.xlu0 %v1015, 32
    %v1024 = vpop.permute.xlu0 %1023
    %1025 = vrot.lane.b32.xlu0 %v1018, 32
    %v1026 = vpop.permute.xlu0 %1025
    %v1027 = vsel %vm84, %v1020, %v999
    %v1028 = vsel %vm84, %v1022, %v1000
    %v1029 = vsel %vm84, %v1024, %v1001
    %v1030 = vsel %vm84, %v1026, %v1002
    %v1031 = vmul.f32 %v1027, %v97
    %v1032 = vmul.f32 %v1028, %v97
    %v1033 = vmul.f32 %v1029, %v97
    %v1034 = vmul.f32 %v1030, %v97
    %v1035 = vmul.f32 %v1027, %v106
    %v1036 = vmul.f32 %v1028, %v106
    %v1037 = vmul.f32 %v1029, %v106
    %v1038 = vmul.f32 %v1030, %v106
    %1043 = vrot.lane.b32.xlu0 %v999, 31
    %v1044 = vpop.permute.xlu0 %1043
    %1045 = vrot.lane.b32.xlu0 %v1000, 31
    %v1046 = vpop.permute.xlu0 %1045
    %1047 = vrot.lane.b32.xlu0 %v1001, 31
    %v1048 = vpop.permute.xlu0 %1047
    %1049 = vrot.lane.b32.xlu0 %v1002, 31
    %v1050 = vpop.permute.xlu0 %1049
    %1055 = vrot.lane.b32.xlu0 %v1035, 30
    %v1056 = vpop.permute.xlu0 %1055
    %1057 = vrot.lane.b32.xlu0 %v1036, 30
    %v1058 = vpop.permute.xlu0 %1057
    %1059 = vrot.lane.b32.xlu0 %v1037, 30
    %v1060 = vpop.permute.xlu0 %1059
    %1061 = vrot.lane.b32.xlu0 %v1038, 30
    %v1062 = vpop.permute.xlu0 %1061
    %v1063 = vld [vmem:[%s15] sm:$0xff]
    %v1064 = vld [vmem:[%s15 + $0x8] sm:$0xff]
    %v1065 = vld [vmem:[%s15 + $0x10] sm:$0xff]
    %v1066 = vld [vmem:[%s15 + $0x18] sm:$0xff]
    %v1067 = vld [vmem:[%s15 + $0x20] sm:$0xff]
    %v1068 = vld [vmem:[%s15 + $0x28] sm:$0xff]
    %v1069 = vld [vmem:[%s15 + $0x30] sm:$0xff]
    %v1070 = vld [vmem:[%s15 + $0x38] sm:$0xff]
    %v1071 = vld [vmem:[%s16] sm:$0xff]
    %v1072 = vld [vmem:[%s16 + $0x8] sm:$0xff]
    %v1073 = vld [vmem:[%s16 + $0x10] sm:$0xff]
    %v1074 = vld [vmem:[%s16 + $0x18] sm:$0xff]
    %v1075 = vld [vmem:[%s16 + $0x20] sm:$0xff]
    %v1076 = vld [vmem:[%s16 + $0x28] sm:$0xff]
    %v1077 = vld [vmem:[%s16 + $0x30] sm:$0xff]
    %v1078 = vld [vmem:[%s16 + $0x38] sm:$0xff]
    %1080 = vset.pattern.permute.xlu0 0
    %1081 = vperm.xlu0 %1080, %v1071
    %v1082 = vpop.permute.xlu0 %1081
    %1085 = vset.pattern.permute.xlu0 0
    %1086 = vperm.xlu0 %1085, %v1072
    %v1087 = vpop.permute.xlu0 %1086
    %1090 = vset.pattern.permute.xlu0 0
    %1091 = vperm.xlu0 %1090, %v1073
    %v1092 = vpop.permute.xlu0 %1091
    %1095 = vset.pattern.permute.xlu0 0
    %1096 = vperm.xlu0 %1095, %v1074
    %v1097 = vpop.permute.xlu0 %1096
    %1100 = vset.pattern.permute.xlu0 0
    %1101 = vperm.xlu0 %1100, %v1075
    %v1102 = vpop.permute.xlu0 %1101
    %1105 = vset.pattern.permute.xlu0 0
    %1106 = vperm.xlu0 %1105, %v1076
    %v1107 = vpop.permute.xlu0 %1106
    %1110 = vset.pattern.permute.xlu0 0
    %1111 = vperm.xlu0 %1110, %v1077
    %v1112 = vpop.permute.xlu0 %1111
    %1115 = vset.pattern.permute.xlu0 0
    %1116 = vperm.xlu0 %1115, %v1078
    %v1117 = vpop.permute.xlu0 %1116
    %1123 = vrot.lane.b32.xlu0 %v1031, 97
    %v1124 = vpop.permute.xlu0 %1123
    %1125 = vrot.lane.b32.xlu0 %v1032, 97
    %v1126 = vpop.permute.xlu0 %1125
    %1127 = vrot.lane.b32.xlu0 %v1033, 97
    %v1128 = vpop.permute.xlu0 %1127
    %1129 = vrot.lane.b32.xlu0 %v1034, 97
    %v1130 = vpop.permute.xlu0 %1129
    %1131 = vrot.lane.b32.xlu0 %v1044, 97
    %v1132 = vpop.permute.xlu0 %1131
    %1133 = vrot.lane.b32.xlu0 %v1046, 97
    %v1134 = vpop.permute.xlu0 %1133
    %1135 = vrot.lane.b32.xlu0 %v1048, 97
    %v1136 = vpop.permute.xlu0 %1135
    %1137 = vrot.lane.b32.xlu0 %v1050, 97
    %v1138 = vpop.permute.xlu0 %1137
    %1139 = vrot.lane.b32.xlu0 %v1056, 97
    %v1140 = vpop.permute.xlu0 %1139
    %1141 = vrot.lane.b32.xlu0 %v1058, 97
    %v1142 = vpop.permute.xlu0 %1141
    %1143 = vrot.lane.b32.xlu0 %v1060, 97
    %v1144 = vpop.permute.xlu0 %1143
    %1145 = vrot.lane.b32.xlu0 %v1062, 97
    %v1146 = vpop.permute.xlu0 %1145
    %v1160 = vsel %vm901, %v1063, 0
    %v1163 = vsel %vm901, %v1064, 0
    %v1166 = vsel %vm901, %v1065, 0
    %v1169 = vsel %vm901, %v1066, 0
    %v1172 = vsel %vm901, %v1067, 0
    %v1175 = vsel %vm901, %v1068, 0
    %v1178 = vsel %vm901, %v1069, 0
    %v1181 = vsel %vm901, %v1070, 0
    %1183 = vmatprep.subr.mxu0 0.0
    %1184 = vmatpush1.msra.mxu0 0.0
    %1185 = vmatprep.subr.mxu0 0.0
    %1186 = vmatpush1.msra.mxu0 0.0
    %1187 = vmatprep.subr.mxu0 0.0
    %1188 = vmatpush1.msra.mxu0 0.0
    %1189 = vmatprep.subr.mxu0 0.0
    %1190 = vmatpush1.msra.mxu0 0.0
    %1191 = vmatprep.subr.mxu0 0.0
    %1192 = vmatpush1.msra.mxu0 %v1146
    %1193 = vmatprep.subr.mxu0 0.0
    %1194 = vmatpush1.msra.mxu0 %v1144
    %1195 = vmatprep.subr.mxu0 0.0
    %1196 = vmatpush1.msra.mxu0 %v1142
    %1197 = vmatprep.subr.mxu0 0.0
    %1198 = vmatpush1.msra.mxu0 %v1140
    %1199 = vmatprep.subr.mxu0 0.0
    %1200 = vmatpush1.msra.mxu0 %v1138
    %1201 = vmatprep.subr.mxu0 0.0
    %1202 = vmatpush1.msra.mxu0 %v1136
    %1203 = vmatprep.subr.mxu0 0.0
    %1204 = vmatpush1.msra.mxu0 %v1134
    %1205 = vmatprep.subr.mxu0 0.0
    %1206 = vmatpush1.msra.mxu0 %v1132
    %1207 = vmatprep.subr.mxu0 0.0
    %1208 = vmatpush1.msra.mxu0 %v1130
    %1209 = vmatprep.subr.mxu0 0.0
    %1210 = vmatpush1.msra.mxu0 %v1128
    %1211 = vmatprep.subr.mxu0 0.0
    %1212 = vmatpush1.msra.mxu0 %v1126
    %1213 = vmatprep.subr.mxu0 0.0
    %1214 = vmatpush1.msra.mxu0 %v1124
    %1215 = vmatprep.subr.mxu0 0.0
    %1216 = vmatpush2.msra.mxu0 0.0
    %1217 = vmatprep.subr.mxu0 0.0
    %1218 = vmatpush2.msra.mxu0 0.0
    %1219 = vmatprep.subr.mxu0 0.0
    %1220 = vmatpush2.msra.mxu0 0.0
    %1221 = vmatprep.subr.mxu0 0.0
    %1222 = vmatpush2.msra.mxu0 0.0
    %1223 = vmatprep.subr.mxu0 0.0
    %1224 = vmatpush2.msra.mxu0 0.0
    %1225 = vmatprep.subr.mxu0 0.0
    %1226 = vmatpush2.msra.mxu0 0.0
    %1227 = vmatprep.subr.mxu0 0.0
    %1228 = vmatpush2.msra.mxu0 0.0
    %1229 = vmatprep.subr.mxu0 0.0
    %1230 = vmatpush2.msra.mxu0 0.0
    %1231 = vmatprep.subr.mxu0 0.0
    %1232 = vmatpush2.msra.mxu0 0.0
    %1233 = vmatprep.subr.mxu0 0.0
    %1234 = vmatpush2.msra.mxu0 0.0
    %1235 = vmatprep.subr.mxu0 0.0
    %1236 = vmatpush2.msra.mxu0 0.0
    %1237 = vmatprep.subr.mxu0 0.0
    %1238 = vmatpush2.msra.mxu0 0.0
    %1239 = vmatprep.subr.mxu0 0.0
    %1240 = vmatpush2.msra.mxu0 0.0
    %1241 = vmatprep.subr.mxu0 0.0
    %1242 = vmatpush2.msra.mxu0 0.0
    %1243 = vmatprep.subr.mxu0 0.0
    %1244 = vmatpush2.msra.mxu0 0.0
    %1245 = vmatprep.subr.mxu0 0.0
    %1246 = vmatpush2.msra.mxu0 0.0
    %1247 = vmatprep.mubr.f32.mxu0 0.0
    %1248 = vmatmul.mubr.f32.gmra.mxu0 %v1160
    %v1249 = vpop.f32.mrf.mxu0
    %v1250 = vadd.f32 %v1082, %v1249
    %v1251 = vpop.f32.mrf.mxu0
    %1252 = vmatprep.mubr.f32.mxu0 0.0
    %1253 = vmatmul.mubr.f32.gmra.mxu0 %v1163
    %v1254 = vpop.f32.mrf.mxu0
    %v1255 = vadd.f32 %v1087, %v1254
    %v1256 = vpop.f32.mrf.mxu0
    %1257 = vmatprep.mubr.f32.mxu0 0.0
    %1258 = vmatmul.mubr.f32.gmra.mxu0 %v1166
    %v1259 = vpop.f32.mrf.mxu0
    %v1260 = vadd.f32 %v1092, %v1259
    %v1261 = vpop.f32.mrf.mxu0
    %1262 = vmatprep.mubr.f32.mxu0 0.0
    %1263 = vmatmul.mubr.f32.gmra.mxu0 %v1169
    %v1264 = vpop.f32.mrf.mxu0
    %v1265 = vadd.f32 %v1097, %v1264
    %v1266 = vpop.f32.mrf.mxu0
    %1267 = vmatprep.mubr.f32.mxu0 0.0
    %1268 = vmatmul.mubr.f32.gmra.mxu0 %v1172
    %v1269 = vpop.f32.mrf.mxu0
    %v1270 = vadd.f32 %v1102, %v1269
    %v1271 = vpop.f32.mrf.mxu0
    %1272 = vmatprep.mubr.f32.mxu0 0.0
    %1273 = vmatmul.mubr.f32.gmra.mxu0 %v1175
    %v1274 = vpop.f32.mrf.mxu0
    %v1275 = vadd.f32 %v1107, %v1274
    %v1276 = vpop.f32.mrf.mxu0
    %1277 = vmatprep.mubr.f32.mxu0 0.0
    %1278 = vmatmul.mubr.f32.gmra.mxu0 %v1178
    %v1279 = vpop.f32.mrf.mxu0
    %v1280 = vadd.f32 %v1112, %v1279
    %v1281 = vpop.f32.mrf.mxu0
    %1282 = vmatprep.mubr.f32.mxu0 0.0
    %1283 = vmatmul.mubr.f32.gmra.mxu0 %v1181
    %v1284 = vpop.f32.mrf.mxu0
    %v1285 = vadd.f32 %v1117, %v1284
    %v1286 = vpop.f32.mrf.mxu0
    %1287 = vdwg.mxu0
    %vm1288 = vcmp.gt.f32.partialorder %v1250, 0.0
    %vm1289 = vcmp.gt.f32.partialorder %v1255, 0.0
    %vm1290 = vcmp.gt.f32.partialorder %v1260, 0.0
    %vm1291 = vcmp.gt.f32.partialorder %v1265, 0.0
    %vm1292 = vcmp.gt.f32.partialorder %v1270, 0.0
    %vm1293 = vcmp.gt.f32.partialorder %v1275, 0.0
    %vm1294 = vcmp.gt.f32.partialorder %v1280, 0.0
    %vm1295 = vcmp.gt.f32.partialorder %v1285, 0.0
    %v1296 = vmul.f32 %v1250, 0.2
    %v1297 = vmul.f32 %v1255, 0.2
    %v1298 = vmul.f32 %v1260, 0.2
    %v1299 = vmul.f32 %v1265, 0.2
    %v1300 = vmul.f32 %v1270, 0.2
    %v1301 = vmul.f32 %v1275, 0.2
    %v1302 = vmul.f32 %v1280, 0.2
    %v1303 = vmul.f32 %v1285, 0.2
    %v1304 = vsel %vm1288, %v1250, %v1296
    %v1305 = vsel %vm1289, %v1255, %v1297
    %v1306 = vsel %vm1290, %v1260, %v1298
    %v1307 = vsel %vm1291, %v1265, %v1299
    %v1308 = vsel %vm1292, %v1270, %v1300
    %v1309 = vsel %vm1293, %v1275, %v1301
    %v1310 = vsel %vm1294, %v1280, %v1302
    %v1311 = vsel %vm1295, %v1285, %v1303
    %1312 = vrot.lane.b32.xlu0 %v1304, 32
    %v1313 = vpop.permute.xlu0 %1312
    %v1314 = vsel %vm84, %v1313, %v1304
    %1315 = vrot.lane.b32.xlu0 %v1305, 32
    %v1316 = vpop.permute.xlu0 %1315
    %v1317 = vsel %vm84, %v1316, %v1305
    %1318 = vrot.lane.b32.xlu0 %v1306, 32
    %v1319 = vpop.permute.xlu0 %1318
    %v1320 = vsel %vm84, %v1319, %v1306
    %1321 = vrot.lane.b32.xlu0 %v1307, 32
    %v1322 = vpop.permute.xlu0 %1321
    %v1323 = vsel %vm84, %v1322, %v1307
    %1324 = vrot.lane.b32.xlu0 %v1308, 32
    %v1325 = vpop.permute.xlu0 %1324
    %v1326 = vsel %vm84, %v1325, %v1308
    %1327 = vrot.lane.b32.xlu0 %v1309, 32
    %v1328 = vpop.permute.xlu0 %1327
    %v1329 = vsel %vm84, %v1328, %v1309
    %1330 = vrot.lane.b32.xlu0 %v1310, 32
    %v1331 = vpop.permute.xlu0 %1330
    %v1332 = vsel %vm84, %v1331, %v1310
    %1333 = vrot.lane.b32.xlu0 %v1311, 32
    %v1334 = vpop.permute.xlu0 %1333
    %v1335 = vsel %vm84, %v1334, %v1311
    %1336 = vrot.lane.b32.xlu0 %v1314, 32
    %v1337 = vpop.permute.xlu0 %1336
    %1338 = vrot.lane.b32.xlu0 %v1317, 32
    %v1339 = vpop.permute.xlu0 %1338
    %1340 = vrot.lane.b32.xlu0 %v1320, 32
    %v1341 = vpop.permute.xlu0 %1340
    %1342 = vrot.lane.b32.xlu0 %v1323, 32
    %v1343 = vpop.permute.xlu0 %1342
    %1344 = vrot.lane.b32.xlu0 %v1326, 32
    %v1345 = vpop.permute.xlu0 %1344
    %1346 = vrot.lane.b32.xlu0 %v1329, 32
    %v1347 = vpop.permute.xlu0 %1346
    %1348 = vrot.lane.b32.xlu0 %v1332, 32
    %v1349 = vpop.permute.xlu0 %1348
    %1350 = vrot.lane.b32.xlu0 %v1335, 32
    %v1351 = vpop.permute.xlu0 %1350
    %v1352 = vsel %vm84, %v1337, %v1304
    %v1353 = vsel %vm84, %v1339, %v1305
    %v1354 = vsel %vm84, %v1341, %v1306
    %v1355 = vsel %vm84, %v1343, %v1307
    %v1356 = vsel %vm84, %v1345, %v1308
    %v1357 = vsel %vm84, %v1347, %v1309
    %v1358 = vsel %vm84, %v1349, %v1310
    %v1359 = vsel %vm84, %v1351, %v1311
    %v1360 = vmul.f32 %v1352, %v97
    %v1361 = vmul.f32 %v1353, %v97
    %v1362 = vmul.f32 %v1354, %v97
    %v1363 = vmul.f32 %v1355, %v97
    %v1364 = vmul.f32 %v1356, %v97
    %v1365 = vmul.f32 %v1357, %v97
    %v1366 = vmul.f32 %v1358, %v97
    %v1367 = vmul.f32 %v1359, %v97
    %v1368 = vmul.f32 %v1352, %v106
    %v1369 = vmul.f32 %v1353, %v106
    %v1370 = vmul.f32 %v1354, %v106
    %v1371 = vmul.f32 %v1355, %v106
    %v1372 = vmul.f32 %v1356, %v106
    %v1373 = vmul.f32 %v1357, %v106
    %v1374 = vmul.f32 %v1358, %v106
    %v1375 = vmul.f32 %v1359, %v106
    %1384 = vrot.lane.b32.xlu0 %v1304, 31
    %v1385 = vpop.permute.xlu0 %1384
    %1386 = vrot.lane.b32.xlu0 %v1305, 31
    %v1387 = vpop.permute.xlu0 %1386
    %1388 = vrot.lane.b32.xlu0 %v1306, 31
    %v1389 = vpop.permute.xlu0 %1388
    %1390 = vrot.lane.b32.xlu0 %v1307, 31
    %v1391 = vpop.permute.xlu0 %1390
    %1392 = vrot.lane.b32.xlu0 %v1308, 31
    %v1393 = vpop.permute.xlu0 %1392
    %1394 = vrot.lane.b32.xlu0 %v1309, 31
    %v1395 = vpop.permute.xlu0 %1394
    %1396 = vrot.lane.b32.xlu0 %v1310, 31
    %v1397 = vpop.permute.xlu0 %1396
    %1398 = vrot.lane.b32.xlu0 %v1311, 31
    %v1399 = vpop.permute.xlu0 %1398
    %1408 = vrot.lane.b32.xlu0 %v1368, 30
    %v1409 = vpop.permute.xlu0 %1408
    %1410 = vrot.lane.b32.xlu0 %v1369, 30
    %v1411 = vpop.permute.xlu0 %1410
    %1412 = vrot.lane.b32.xlu0 %v1370, 30
    %v1413 = vpop.permute.xlu0 %1412
    %1414 = vrot.lane.b32.xlu0 %v1371, 30
    %v1415 = vpop.permute.xlu0 %1414
    %1416 = vrot.lane.b32.xlu0 %v1372, 30
    %v1417 = vpop.permute.xlu0 %1416
    %1418 = vrot.lane.b32.xlu0 %v1373, 30
    %v1419 = vpop.permute.xlu0 %1418
    %1420 = vrot.lane.b32.xlu0 %v1374, 30
    %v1421 = vpop.permute.xlu0 %1420
    %1422 = vrot.lane.b32.xlu0 %v1375, 30
    %v1423 = vpop.permute.xlu0 %1422
    %v1424 = vld [vmem:[%s17] sm:$0xff]
    %v1425 = vld [vmem:[%s17 + $0x8] sm:$0xff]
    %v1426 = vld [vmem:[%s17 + $0x10] sm:$0xff]
    %v1427 = vld [vmem:[%s17 + $0x18] sm:$0xff]
    %v1428 = vld [vmem:[%s17 + $0x20] sm:$0xff]
    %v1429 = vld [vmem:[%s17 + $0x28] sm:$0xff]
    %v1430 = vld [vmem:[%s17 + $0x30] sm:$0xff]
    %v1431 = vld [vmem:[%s17 + $0x38] sm:$0xff]
    %v1432 = vld [vmem:[%s17 + $0x40] sm:$0xff]
    %v1433 = vld [vmem:[%s17 + $0x48] sm:$0xff]
    %v1434 = vld [vmem:[%s17 + $0x50] sm:$0xff]
    %v1435 = vld [vmem:[%s17 + $0x58] sm:$0xff]
    %v1436 = vld [vmem:[%s17 + $0x60] sm:$0xff]
    %v1437 = vld [vmem:[%s17 + $0x68] sm:$0xff]
    %v1438 = vld [vmem:[%s17 + $0x70] sm:$0xff]
    %v1439 = vld [vmem:[%s17 + $0x78] sm:$0xff]
    %v1440 = vld [vmem:[%s18] sm:$0xff]
    %v1441 = vld [vmem:[%s18 + $0x8] sm:$0xff]
    %v1442 = vld [vmem:[%s18 + $0x10] sm:$0xff]
    %v1443 = vld [vmem:[%s18 + $0x18] sm:$0xff]
    %v1444 = vld [vmem:[%s18 + $0x20] sm:$0xff]
    %v1445 = vld [vmem:[%s18 + $0x28] sm:$0xff]
    %v1446 = vld [vmem:[%s18 + $0x30] sm:$0xff]
    %v1447 = vld [vmem:[%s18 + $0x38] sm:$0xff]
    %1449 = vset.pattern.permute.xlu0 0
    %1450 = vperm.xlu0 %1449, %v1440
    %v1451 = vpop.permute.xlu0 %1450
    %1454 = vset.pattern.permute.xlu0 0
    %1455 = vperm.xlu0 %1454, %v1441
    %v1456 = vpop.permute.xlu0 %1455
    %1459 = vset.pattern.permute.xlu0 0
    %1460 = vperm.xlu0 %1459, %v1442
    %v1461 = vpop.permute.xlu0 %1460
    %1464 = vset.pattern.permute.xlu0 0
    %1465 = vperm.xlu0 %1464, %v1443
    %v1466 = vpop.permute.xlu0 %1465
    %1469 = vset.pattern.permute.xlu0 0
    %1470 = vperm.xlu0 %1469, %v1444
    %v1471 = vpop.permute.xlu0 %1470
    %1474 = vset.pattern.permute.xlu0 0
    %1475 = vperm.xlu0 %1474, %v1445
    %v1476 = vpop.permute.xlu0 %1475
    %1479 = vset.pattern.permute.xlu0 0
    %1480 = vperm.xlu0 %1479, %v1446
    %v1481 = vpop.permute.xlu0 %1480
    %1484 = vset.pattern.permute.xlu0 0
    %1485 = vperm.xlu0 %1484, %v1447
    %v1486 = vpop.permute.xlu0 %1485
    %1496 = vrot.lane.b32.xlu0 %v1360, 97
    %v1497 = vpop.permute.xlu0 %1496
    %1498 = vrot.lane.b32.xlu0 %v1361, 97
    %v1499 = vpop.permute.xlu0 %1498
    %1500 = vrot.lane.b32.xlu0 %v1362, 97
    %v1501 = vpop.permute.xlu0 %1500
    %1502 = vrot.lane.b32.xlu0 %v1363, 97
    %v1503 = vpop.permute.xlu0 %1502
    %1504 = vrot.lane.b32.xlu0 %v1364, 97
    %v1505 = vpop.permute.xlu0 %1504
    %1506 = vrot.lane.b32.xlu0 %v1365, 97
    %v1507 = vpop.permute.xlu0 %1506
    %1508 = vrot.lane.b32.xlu0 %v1366, 97
    %v1509 = vpop.permute.xlu0 %1508
    %1510 = vrot.lane.b32.xlu0 %v1367, 97
    %v1511 = vpop.permute.xlu0 %1510
    %1512 = vrot.lane.b32.xlu0 %v1385, 97
    %v1513 = vpop.permute.xlu0 %1512
    %1514 = vrot.lane.b32.xlu0 %v1387, 97
    %v1515 = vpop.permute.xlu0 %1514
    %1516 = vrot.lane.b32.xlu0 %v1389, 97
    %v1517 = vpop.permute.xlu0 %1516
    %1518 = vrot.lane.b32.xlu0 %v1391, 97
    %v1519 = vpop.permute.xlu0 %1518
    %1520 = vrot.lane.b32.xlu0 %v1393, 97
    %v1521 = vpop.permute.xlu0 %1520
    %1522 = vrot.lane.b32.xlu0 %v1395, 97
    %v1523 = vpop.permute.xlu0 %1522
    %1524 = vrot.lane.b32.xlu0 %v1397, 97
    %v1525 = vpop.permute.xlu0 %1524
    %1526 = vrot.lane.b32.xlu0 %v1399, 97
    %v1527 = vpop.permute.xlu0 %1526
    %1528 = vrot.lane.b32.xlu0 %v1409, 97
    %v1529 = vpop.permute.xlu0 %1528
    %1530 = vrot.lane.b32.xlu0 %v1411, 97
    %v1531 = vpop.permute.xlu0 %1530
    %1532 = vrot.lane.b32.xlu0 %v1413, 97
    %v1533 = vpop.permute.xlu0 %1532
    %1534 = vrot.lane.b32.xlu0 %v1415, 97
    %v1535 = vpop.permute.xlu0 %1534
    %1536 = vrot.lane.b32.xlu0 %v1417, 97
    %v1537 = vpop.permute.xlu0 %1536
    %1538 = vrot.lane.b32.xlu0 %v1419, 97
    %v1539 = vpop.permute.xlu0 %1538
    %1540 = vrot.lane.b32.xlu0 %v1421, 97
    %v1541 = vpop.permute.xlu0 %1540
    %1542 = vrot.lane.b32.xlu0 %v1423, 97
    %v1543 = vpop.permute.xlu0 %1542
    %vm1568 = vcmask 523264
    %v1570 = vsel %vm1568, %v1425, 0
    %v1573 = vsel %vm1568, %v1427, 0
    %v1576 = vsel %vm1568, %v1429, 0
    %v1579 = vsel %vm1568, %v1431, 0
    %v1582 = vsel %vm1568, %v1433, 0
    %v1585 = vsel %vm1568, %v1435, 0
    %v1588 = vsel %vm1568, %v1437, 0
    %v1591 = vsel %vm1568, %v1439, 0
    %1593 = vmatprep.subr.mxu0 0.0
    %1594 = vmatpush1.msra.mxu0 %v1527
    %1595 = vmatprep.subr.mxu0 0.0
    %1596 = vmatpush1.msra.mxu0 %v1525
    %1597 = vmatprep.subr.mxu0 0.0
    %1598 = vmatpush1.msra.mxu0 %v1523
    %1599 = vmatprep.subr.mxu0 0.0
    %1600 = vmatpush1.msra.mxu0 %v1521
    %1601 = vmatprep.subr.mxu0 0.0
    %1602 = vmatpush1.msra.mxu0 %v1519
    %1603 = vmatprep.subr.mxu0 0.0
    %1604 = vmatpush1.msra.mxu0 %v1517
    %1605 = vmatprep.subr.mxu0 0.0
    %1606 = vmatpush1.msra.mxu0 %v1515
    %1607 = vmatprep.subr.mxu0 0.0
    %1608 = vmatpush1.msra.mxu0 %v1513
    %1609 = vmatprep.subr.mxu0 0.0
    %1610 = vmatpush1.msra.mxu0 %v1511
    %1611 = vmatprep.subr.mxu0 0.0
    %1612 = vmatpush1.msra.mxu0 %v1509
    %1613 = vmatprep.subr.mxu0 0.0
    %1614 = vmatpush1.msra.mxu0 %v1507
    %1615 = vmatprep.subr.mxu0 0.0
    %1616 = vmatpush1.msra.mxu0 %v1505
    %1617 = vmatprep.subr.mxu0 0.0
    %1618 = vmatpush1.msra.mxu0 %v1503
    %1619 = vmatprep.subr.mxu0 0.0
    %1620 = vmatpush1.msra.mxu0 %v1501
    %1621 = vmatprep.subr.mxu0 0.0
    %1622 = vmatpush1.msra.mxu0 %v1499
    %1623 = vmatprep.subr.mxu0 0.0
    %1624 = vmatpush1.msra.mxu0 %v1497
    %1625 = vmatprep.subr.mxu0 0.0
    %1626 = vmatpush2.msra.mxu0 0.0
    %1627 = vmatprep.subr.mxu0 0.0
    %1628 = vmatpush2.msra.mxu0 0.0
    %1629 = vmatprep.subr.mxu0 0.0
    %1630 = vmatpush2.msra.mxu0 0.0
    %1631 = vmatprep.subr.mxu0 0.0
    %1632 = vmatpush2.msra.mxu0 0.0
    %1633 = vmatprep.subr.mxu0 0.0
    %1634 = vmatpush2.msra.mxu0 0.0
    %1635 = vmatprep.subr.mxu0 0.0
    %1636 = vmatpush2.msra.mxu0 0.0
    %1637 = vmatprep.subr.mxu0 0.0
    %1638 = vmatpush2.msra.mxu0 0.0
    %1639 = vmatprep.subr.mxu0 0.0
    %1640 = vmatpush2.msra.mxu0 0.0
    %1641 = vmatprep.subr.mxu0 0.0
    %1642 = vmatpush2.msra.mxu0 %v1543
    %1643 = vmatprep.subr.mxu0 0.0
    %1644 = vmatpush2.msra.mxu0 %v1541
    %1645 = vmatprep.subr.mxu0 0.0
    %1646 = vmatpush2.msra.mxu0 %v1539
    %1647 = vmatprep.subr.mxu0 0.0
    %1648 = vmatpush2.msra.mxu0 %v1537
    %1649 = vmatprep.subr.mxu0 0.0
    %1650 = vmatpush2.msra.mxu0 %v1535
    %1651 = vmatprep.subr.mxu0 0.0
    %1652 = vmatpush2.msra.mxu0 %v1533
    %1653 = vmatprep.subr.mxu0 0.0
    %1654 = vmatpush2.msra.mxu0 %v1531
    %1655 = vmatprep.subr.mxu0 0.0
    %1656 = vmatpush2.msra.mxu0 %v1529
    %1657 = vmatprep.mubr.f32.mxu0 %v1570
    %1658 = vmatmul.mubr.f32.gmra.mxu0 %v1424
    %v1659 = vpop.f32.mrf.mxu0
    %v1660 = vadd.f32 %v1451, %v1659
    %v1661 = vpop.f32.mrf.mxu0
    %1662 = vmatprep.mubr.f32.mxu0 %v1573
    %1663 = vmatmul.mubr.f32.gmra.mxu0 %v1426
    %v1664 = vpop.f32.mrf.mxu0
    %v1665 = vadd.f32 %v1456, %v1664
    %v1666 = vpop.f32.mrf.mxu0
    %1667 = vmatprep.mubr.f32.mxu0 %v1576
    %1668 = vmatmul.mubr.f32.gmra.mxu0 %v1428
    %v1669 = vpop.f32.mrf.mxu0
    %v1670 = vadd.f32 %v1461, %v1669
    %v1671 = vpop.f32.mrf.mxu0
    %1672 = vmatprep.mubr.f32.mxu0 %v1579
    %1673 = vmatmul.mubr.f32.gmra.mxu0 %v1430
    %v1674 = vpop.f32.mrf.mxu0
    %v1675 = vadd.f32 %v1466, %v1674
    %v1676 = vpop.f32.mrf.mxu0
    %1677 = vmatprep.mubr.f32.mxu0 %v1582
    %1678 = vmatmul.mubr.f32.gmra.mxu0 %v1432
    %v1679 = vpop.f32.mrf.mxu0
    %v1680 = vadd.f32 %v1471, %v1679
    %v1681 = vpop.f32.mrf.mxu0
    %1682 = vmatprep.mubr.f32.mxu0 %v1585
    %1683 = vmatmul.mubr.f32.gmra.mxu0 %v1434
    %v1684 = vpop.f32.mrf.mxu0
    %v1685 = vadd.f32 %v1476, %v1684
    %v1686 = vpop.f32.mrf.mxu0
    %1687 = vmatprep.mubr.f32.mxu0 %v1588
    %1688 = vmatmul.mubr.f32.gmra.mxu0 %v1436
    %v1689 = vpop.f32.mrf.mxu0
    %v1690 = vadd.f32 %v1481, %v1689
    %v1691 = vpop.f32.mrf.mxu0
    %1692 = vmatprep.mubr.f32.mxu0 %v1591
    %1693 = vmatmul.mubr.f32.gmra.mxu0 %v1438
    %v1694 = vpop.f32.mrf.mxu0
    %v1695 = vadd.f32 %v1486, %v1694
    %v1696 = vpop.f32.mrf.mxu0
    %1697 = vdwg.mxu0
    %v1698 = vadd.f32 %v1250, %v1660
    %v1699 = vadd.f32 %v1255, %v1665
    %v1700 = vadd.f32 %v1260, %v1670
    %v1701 = vadd.f32 %v1265, %v1675
    %v1702 = vadd.f32 %v1270, %v1680
    %v1703 = vadd.f32 %v1275, %v1685
    %v1704 = vadd.f32 %v1280, %v1690
    %v1705 = vadd.f32 %v1285, %v1695
    %1706 = vst.msk [vmem:[%s25] sm:$0xff] %vm317, %v1698
    %1707 = vst.msk [vmem:[%s25 + $0x8] sm:$0xff] %vm317, %v1699
    %1708 = vst.msk [vmem:[%s25 + $0x10] sm:$0xff] %vm317, %v1700
    %1709 = vst.msk [vmem:[%s25 + $0x18] sm:$0xff] %vm317, %v1701
    %1710 = vst.msk [vmem:[%s25 + $0x20] sm:$0xff] %vm317, %v1702
    %1711 = vst.msk [vmem:[%s25 + $0x28] sm:$0xff] %vm317, %v1703
    %1712 = vst.msk [vmem:[%s25 + $0x30] sm:$0xff] %vm317, %v1704
    %1713 = vst.msk [vmem:[%s25 + $0x38] sm:$0xff] %vm317, %v1705
    %v1714 = vld [vmem:[%s19] sm:$0xff]
    %v1715 = vld [vmem:[%s19 + $0x8] sm:$0xff]
    %v1716 = vld [vmem:[%s19 + $0x10] sm:$0xff]
    %v1717 = vld [vmem:[%s19 + $0x18] sm:$0xff]
    %v1718 = vld [vmem:[%s19 + $0x20] sm:$0xff]
    %v1719 = vld [vmem:[%s19 + $0x28] sm:$0xff]
    %v1720 = vld [vmem:[%s19 + $0x30] sm:$0xff]
    %v1721 = vld [vmem:[%s19 + $0x38] sm:$0xff]
    %v1722 = vmul.f32 %v1698, %v1714
    %v1723 = vmul.f32 %v1699, %v1715
    %v1724 = vmul.f32 %v1700, %v1716
    %v1725 = vmul.f32 %v1701, %v1717
    %v1726 = vmul.f32 %v1702, %v1718
    %v1727 = vmul.f32 %v1703, %v1719
    %v1728 = vmul.f32 %v1704, %v1720
    %v1729 = vmul.f32 %v1705, %v1721
    %v1730 = vsel %vm317, %v1722, 0.0
    %v1731 = vsel %vm317, %v1723, 0.0
    %v1732 = vadd.f32 %v1730, %v1731
    %v1733 = vsel %vm317, %v1724, 0.0
    %v1734 = vadd.f32 %v1732, %v1733
    %v1735 = vsel %vm317, %v1725, 0.0
    %v1736 = vadd.f32 %v1734, %v1735
    %v1737 = vsel %vm317, %v1726, 0.0
    %v1738 = vadd.f32 %v1736, %v1737
    %v1739 = vsel %vm317, %v1727, 0.0
    %v1740 = vadd.f32 %v1738, %v1739
    %v1741 = vsel %vm317, %v1728, 0.0
    %v1742 = vadd.f32 %v1740, %v1741
    %v1743 = vsel %vm317, %v1729, 0.0
    %v1744 = vadd.f32 %v1742, %v1743
    %v1745 = vrot.slane %v1744, 4
    %v1746 = vadd.f32 %v1744, %v1745
    %v1747 = vrot.slane %v1746, 2
    %v1748 = vadd.f32 %v1746, %v1747
    %v1749 = vrot.slane %v1748, 1
    %v1750 = vadd.f32 %v1748, %v1749
    %v1751 = vld [vmem:[%s20] sm:$0xff]
    %v1752 = vld [vmem:[%s20 + $0x8] sm:$0xff]
    %v1753 = vld [vmem:[%s20 + $0x10] sm:$0xff]
    %v1754 = vld [vmem:[%s20 + $0x18] sm:$0xff]
    %v1755 = vld [vmem:[#allocation2] sm:$0x1]
    %1757 = vset.pattern.permute.xlu0 0
    %1758 = vperm.xlu0 %1757, %v1755
    %v1759 = vpop.permute.xlu0 %1758
    %v1761 = vlaneseq
    %v1762 = vshrl.u32 %v1761, 7
    %v1763 = vsub.s32 0, %v1762
    %v1764 = vrot.slane %v1759, %v1763
    %v1766 = vsel %vm317, %v1750, 0
    %1768 = vmatprep.subr.mxu0 0.0
    %1769 = vmatpush1.msra.mxu0 0.0
    %1770 = vmatprep.subr.mxu0 0.0
    %1771 = vmatpush1.msra.mxu0 0.0
    %1772 = vmatprep.subr.mxu0 0.0
    %1773 = vmatpush1.msra.mxu0 0.0
    %1774 = vmatprep.subr.mxu0 0.0
    %1775 = vmatpush1.msra.mxu0 0.0
    %1776 = vmatprep.subr.mxu0 0.0
    %1777 = vmatpush1.msra.mxu0 0.0
    %1778 = vmatprep.subr.mxu0 0.0
    %1779 = vmatpush1.msra.mxu0 0.0
    %1780 = vmatprep.subr.mxu0 0.0
    %1781 = vmatpush1.msra.mxu0 0.0
    %1782 = vmatprep.subr.mxu0 0.0
    %1783 = vmatpush1.msra.mxu0 0.0
    %1784 = vmatprep.subr.mxu0 0.0
    %1785 = vmatpush1.msra.mxu0 0.0
    %1786 = vmatprep.subr.mxu0 0.0
    %1787 = vmatpush1.msra.mxu0 0.0
    %1788 = vmatprep.subr.mxu0 0.0
    %1789 = vmatpush1.msra.mxu0 0.0
    %1790 = vmatprep.subr.mxu0 0.0
    %1791 = vmatpush1.msra.mxu0 0.0
    %1792 = vmatprep.subr.mxu0 0.0
    %1793 = vmatpush1.msra.mxu0 %v1754
    %1794 = vmatprep.subr.mxu0 0.0
    %1795 = vmatpush1.msra.mxu0 %v1753
    %1796 = vmatprep.subr.mxu0 0.0
    %1797 = vmatpush1.msra.mxu0 %v1752
    %1798 = vmatprep.subr.mxu0 0.0
    %1799 = vmatpush1.msra.mxu0 %v1751
    %1800 = vmatprep.subr.mxu0 0.0
    %1801 = vmatpush2.msra.mxu0 0.0
    %1802 = vmatprep.subr.mxu0 0.0
    %1803 = vmatpush2.msra.mxu0 0.0
    %1804 = vmatprep.subr.mxu0 0.0
    %1805 = vmatpush2.msra.mxu0 0.0
    %1806 = vmatprep.subr.mxu0 0.0
    %1807 = vmatpush2.msra.mxu0 0.0
    %1808 = vmatprep.subr.mxu0 0.0
    %1809 = vmatpush2.msra.mxu0 0.0
    %1810 = vmatprep.subr.mxu0 0.0
    %1811 = vmatpush2.msra.mxu0 0.0
    %1812 = vmatprep.subr.mxu0 0.0
    %1813 = vmatpush2.msra.mxu0 0.0
    %1814 = vmatprep.subr.mxu0 0.0
    %1815 = vmatpush2.msra.mxu0 0.0
    %1816 = vmatprep.subr.mxu0 0.0
    %1817 = vmatpush2.msra.mxu0 0.0
    %1818 = vmatprep.subr.mxu0 0.0
    %1819 = vmatpush2.msra.mxu0 0.0
    %1820 = vmatprep.subr.mxu0 0.0
    %1821 = vmatpush2.msra.mxu0 0.0
    %1822 = vmatprep.subr.mxu0 0.0
    %1823 = vmatpush2.msra.mxu0 0.0
    %1824 = vmatprep.subr.mxu0 0.0
    %1825 = vmatpush2.msra.mxu0 0.0
    %1826 = vmatprep.subr.mxu0 0.0
    %1827 = vmatpush2.msra.mxu0 0.0
    %1828 = vmatprep.subr.mxu0 0.0
    %1829 = vmatpush2.msra.mxu0 0.0
    %1830 = vmatprep.subr.mxu0 0.0
    %1831 = vmatpush2.msra.mxu0 0.0
    %1832 = vmatprep.mubr.f32.mxu0 0.0
    %1833 = vmatmul.mubr.f32.gmra.mxu0 %v1766
    %v1834 = vpop.f32.mrf.mxu0
    %v1835 = vadd.f32 %v1764, %v1834
    %v1836 = vpop.f32.mrf.mxu0
    %1837 = vdwg.mxu0
    %vm1838 = vcmask 8192
    %1839 = vst.msk [vmem:[#allocation8] sm:$0x1] %vm1838, %v1835
    // Predicated region
    $region90: #{tpu_custom_call.1} parent=1 // pred_check
      _
    $region91: #{tpu_custom_call.1} parent=1 // pred_check_branch
      %1841 = sbr.rel (0) target = $region93
    $region92: #{tpu_custom_call.1} parent=1 // pred_region
      %s1843 = ssub.s32 128, 128
      %1844 = vsyncadd [#allocation4], %s1843
      %s1846 = sshll.u32 [#allocation3], 4
      %s1847 = int_to_ptr.vmem [resolvable:$true] %s1846
      %1849 = dma.vmem_to_hbm [thread:$0]  %s1847, 128, %s22, [#allocation4]
    $region93: #{tpu_custom_call.1} parent=1 // pred_fallthru
      _
    // Predicated region
    $region94: #{tpu_custom_call.1} parent=1 // pred_check
      _
    $region95: #{tpu_custom_call.1} parent=1 // pred_check_branch
      %1851 = sbr.rel (0) target = $region97
    $region96: #{tpu_custom_call.1} parent=1 // pred_region
      %s1853 = ssub.s32 256, 256
      %1854 = vsyncadd [#allocation6], %s1853
      %s1855 = sshll.u32 [#allocation5], 4
      %s1856 = int_to_ptr.vmem [resolvable:$true] %s1855
      %1861 = dma.vmem_to_hbm [thread:$0]  %s1856, 256, %s23, [#allocation6], 128, 128, 8
    $region97: #{tpu_custom_call.1} parent=1 // pred_fallthru
      _
    // Predicated region
    $region98: #{tpu_custom_call.1} parent=1 // pred_check
      _
    $region99: #{tpu_custom_call.1} parent=1 // pred_check_branch
      %1863 = sbr.rel (0) target = $region101
    $region100: #{tpu_custom_call.1} parent=1 // pred_region
      %s1865 = ssub.s32 512, 512
      %1866 = vsyncadd [#allocation6], %s1865
      %s1867 = sshll.u32 [#allocation7], 4
      %s1868 = int_to_ptr.vmem [resolvable:$true] %s1867
      %1873 = dma.vmem_to_hbm [thread:$0]  %s1868, 512, %s24, [#allocation6], 128, 128, 8
    $region101: #{tpu_custom_call.1} parent=1 // pred_fallthru
      _
    // Predicated region
    $region102: #{tpu_custom_call.1} parent=1 // pred_check
      _
    $region103: #{tpu_custom_call.1} parent=1 // pred_check_branch
      %1875 = sbr.rel (0) target = $region105
    $region104: #{tpu_custom_call.1} parent=1 // pred_region
      _
    $region105: #{tpu_custom_call.1} parent=1 // pred_fallthru
      _
    // Predicated region
    $region106: #{tpu_custom_call.1} parent=1 // pred_check
      _
    $region107: #{tpu_custom_call.1} parent=1 // pred_check_branch
      %1877 = sbr.rel (0) target = $region109
    $region108: #{tpu_custom_call.1} parent=1 // pred_region
      %s1879 = ssub.s32 16, 16
      %1880 = vsyncadd [#allocation9], %s1879
      %s1882 = sshll.u32 [#allocation8], 4
      %s1883 = int_to_ptr.vmem [resolvable:$true] %s1882
      %1885 = dma.vmem_to_hbm [thread:$0]  %s1883, 16, %s26, [#allocation9]
    $region109: #{tpu_custom_call.1} parent=1 // pred_fallthru
      _
    // Predicated region
    $region110: #{tpu_custom_call.1} parent=1 // pred_check
      _
    $region111: #{tpu_custom_call.1} parent=1 // pred_check_branch
      %1887 = sbr.rel (0) target = $region113
    $region112: #{tpu_custom_call.1} parent=1 // pred_region
      %1888 = dma.done [#allocation4], 128
    $region113: #{tpu_custom_call.1} parent=1 // pred_fallthru
      _
    // Predicated region
    $region114: #{tpu_custom_call.1} parent=1 // pred_check
      _
    $region115: #{tpu_custom_call.1} parent=1 // pred_check_branch
      %1890 = sbr.rel (0) target = $region117
    $region116: #{tpu_custom_call.1} parent=1 // pred_region
      %1891 = dma.done [#allocation6], 256
    $region117: #{tpu_custom_call.1} parent=1 // pred_fallthru
      _
    // Predicated region
    $region118: #{tpu_custom_call.1} parent=1 // pred_check
      _
    $region119: #{tpu_custom_call.1} parent=1 // pred_check_branch
      %1893 = sbr.rel (0) target = $region121
    $region120: #{tpu_custom_call.1} parent=1 // pred_region
      %1894 = dma.done [#allocation6], 512
    $region121: #{tpu_custom_call.1} parent=1 // pred_fallthru
      _
    // Predicated region
    $region122: #{tpu_custom_call.1} parent=1 // pred_check
      _
    $region123: #{tpu_custom_call.1} parent=1 // pred_check_branch
      %1896 = sbr.rel (0) target = $region125
    $region124: #{tpu_custom_call.1} parent=1 // pred_region
      _
    $region125: #{tpu_custom_call.1} parent=1 // pred_fallthru
      _
    // Predicated region
    $region126: #{tpu_custom_call.1} parent=1 // pred_check
      _
    $region127: #{tpu_custom_call.1} parent=1 // pred_check_branch
      %1898 = sbr.rel (0) target = $region129
    $region128: #{tpu_custom_call.1} parent=1 // pred_region
      %1899 = dma.done [#allocation9], 16
    $region129: #{tpu_custom_call.1} parent=1 // pred_fallthru
      _
    %1900 = vsyncpa [#allocation4], 1
    %1901 = vsyncpa [#allocation6], 1
    %1902 = vsyncpa [#allocation9], 1

</llo_original>
